<compile_context>
chip_gen: v6e
topology: v6e:2x2x1
jax: 0.10.0
libtpu: 0.0.40
codegen_flags: <defaults>
</compile_context>

<pallas_src>
import functools
import math

import numpy as np
import jax
import jax.numpy as jnp
from jax import lax
from jax.experimental import pallas as pl
from jax.experimental.pallas import tpu as pltpu

# ----- module hyperparameters (defaults of TTFNetLoss.__init__) -------------
ALPHA = 2.0                 # focal alpha (specialized to 2 -> explicit square)
BETA = 4.0                  # focal beta  (specialized to 4 -> square of square)
STRIDE = 4
HEATMAP_LOSS_WEIGHT = 1.0
BOX_LOSS_WEIGHT = 5.0
GAUSSIAN_ALPHA = 0.54
GAUSSIAN_BETA = 0.54

# HBM-bandwidth knob: jnp.bfloat16 halves target traffic on HBM-bound v5e/v6e, but
# perturbs (1-t)^4 weights and can round near-1 gaussian values up to exactly 1.0
# (flipping a negative point to positive). Kept f32 for exact reference semantics.
# TODO(synk): flip to jnp.bfloat16 on bandwidth-bound v5e/v6e after validating.
TARGETS_DTYPE = jnp.float32


# =============================================================================
# Host-side target generation (NumPy glue, mirrors PyTorch get_batch_targets)
# =============================================================================
def gaussian_2d(shape, sigma_x=1, sigma_y=1):
    m, n = [(ss - 1.0) / 2.0 for ss in shape]
    y, x = np.ogrid[-m:m + 1, -n:n + 1]
    h = np.exp(-(x * x / (2 * sigma_x * sigma_x) + y * y / (2 * sigma_y * sigma_y)))
    h[h < np.finfo(h.dtype).eps * h.max()] = 0
    return h


def draw_truncate_gaussian(heatmap, center, h_radius, w_radius, k=1):
    h, w = 2 * h_radius + 1, 2 * w_radius + 1
    sigma_x, sigma_y = w / 6, h / 6
    gaussian = gaussian_2d((h, w), sigma_x=sigma_x, sigma_y=sigma_y)
    x, y = int(center[0]), int(center[1])
    h_radius, w_radius = int(h_radius), int(w_radius)
    height, width = heatmap.shape[0], heatmap.shape[1]
    left, right = int(min(x, w_radius)), int(min(width - x, w_radius + 1))
    top, bottom = int(min(y, h_radius)), int(min(height - y, h_radius + 1))
    masked_heatmap = heatmap[y - top:y + bottom, x - left:x + right]
    masked_gaussian = gaussian[h_radius - top:h_radius + bottom,
                               w_radius - left:w_radius + right]
    if min(masked_gaussian.shape) > 0 and min(masked_heatmap.shape) > 0:
        np.maximum(masked_heatmap, masked_gaussian * k, out=masked_heatmap)
    return heatmap


def get_batch_targets(num_classes, H, W, annotations,
                      gaussian_alpha=GAUSSIAN_ALPHA, gaussian_beta=GAUSSIAN_BETA):
    B = annotations.shape[0]
    batch_heatmap_targets = np.zeros((B, num_classes, H, W), np.float32)
    batch_reg_targets = -np.ones((B, 5, H, W), np.float32)
    for b in range(B):
        annots = annotations[b]
        annots = annots[annots[:, 4] >= 0]
        if annots.shape[0] == 0:
            continue
        wh = annots[:, 2:4] - annots[:, 0:2]
        area = np.log(np.clip(wh[:, 0] * wh[:, 1], 0.0001, None))
        order = np.argsort(-area, kind="stable")          # topk (descending)
        topk_area = area[order]
        annots = annots[order]
        gt_boxes = annots[:, 0:4].copy() / 4.0
        gt_boxes[:, [0, 2]] = np.clip(gt_boxes[:, [0, 2]], 0, W - 1)
        gt_boxes[:, [1, 3]] = np.clip(gt_boxes[:, [1, 3]], 0, H - 1)
        all_h = gt_boxes[:, 3] - gt_boxes[:, 1]
        all_w = gt_boxes[:, 2] - gt_boxes[:, 0]
        centers = np.stack([(gt_boxes[:, 0] + gt_boxes[:, 2]) / 2,
                            (gt_boxes[:, 1] + gt_boxes[:, 3]) / 2], axis=1)
        centers_int = np.trunc(centers)
        h_r_a = np.trunc(all_h / 2.0 * gaussian_alpha)
        w_r_a = np.trunc(all_w / 2.0 * gaussian_alpha)
        h_r_b = np.trunc(all_h / 2.0 * gaussian_beta)
        w_r_b = np.trunc(all_w / 2.0 * gaussian_beta)
        heatmap_b = batch_heatmap_targets[b]
        reg_b = batch_reg_targets[b]
        for i in range(annots.shape[0]):
            per_gt_box = annots[i, 0:4]
            per_gt_class = int(annots[i, 4])
            fake = np.zeros((H, W), np.float32)
            fake = draw_truncate_gaussian(fake, centers_int[i], h_r_a[i], w_r_a[i])
            heatmap_b[per_gt_class] = np.maximum(heatmap_b[per_gt_class], fake)
            if gaussian_alpha != gaussian_beta:
                fake = np.zeros((H, W), np.float32)
                fake = draw_truncate_gaussian(fake, centers_int[i], h_r_b[i], w_r_b[i])
            idxs = fake > 0
            reg_b[0:4, idxs] = per_gt_box[:, None]
            local = fake[idxs]
            center_div = local.sum()
            local = local * topk_area[i]
            reg_b[4, idxs] = local / center_div
    return batch_heatmap_targets, batch_reg_targets


def ttfnet_positions(feature_map_size):
    # TTFNetPositions: per-pixel feature-map coordinates, positions[y, x] = [x, y]
    w, h = feature_map_size
    gx, gy = np.meshgrid(np.arange(w, dtype=np.float32),
                         np.arange(h, dtype=np.float32))
    return np.stack([gx, gy], axis=-1)            # (h, w, 2)


# =============================================================================
# Pallas kernel helpers
# =============================================================================
def _rcp(x):
    """Approx reciprocal on the (idle) EUP slot. All call sites are guarded."""
    return pl.reciprocal(x, approx=True)


def _atan_nonneg(x):
    """arctan for x >= 0 (Cephes atanf-style polynomial); no atan primitive on TPU."""
    t3p8 = 2.414213562373095
    tp8 = 0.4142135623730950
    big = x > t3p8
    mid = jnp.logical_and(x > tp8, jnp.logical_not(big))
    inv_x = _rcp(jnp.maximum(x, 1e-30))
    xr = jnp.where(big, -inv_x,
                   jnp.where(mid, (x - 1.0) * _rcp(x + 1.0), x))
    y = jnp.where(big, jnp.float32(math.pi / 2.0),
                  jnp.where(mid, jnp.float32(math.pi / 4.0), jnp.float32(0.0)))
    z = xr * xr
    poly = (((8.05374449538e-2 * z - 1.38776856032e-1) * z
             + 1.99777106478e-1) * z - 3.33329491539e-1) * z * xr + xr
    return y + poly


def _xy_from_flat(flat_i32, W):
    """(x, y) feature-map coords from the flattened spatial index (W: Python int)."""
    if W & (W - 1) == 0:                       # power of two: exact shift / mask
        shift = int(round(math.log2(W)))
        y = (flat_i32 >> shift).astype(jnp.float32)
        x = (flat_i32 & (W - 1)).astype(jnp.float32)
        return x, y
    # general case: f32 estimate + integer correction (valid for flat < 2**23)
    q = jnp.floor(flat_i32.astype(jnp.float32) * jnp.float32(1.0 / W)).astype(jnp.int32)
    r = flat_i32 - q * W
    for _ in range(3):
        hi = (r >= W).astype(jnp.int32)
        lo = (r < 0).astype(jnp.int32)
        q = q + hi - lo
        r = r - (hi - lo) * W
    return r.astype(jnp.float32), q.astype(jnp.float32)


# =============================================================================
# Fused heatmap-focal + CIoU-box loss kernel
#   inputs  (blocks): hm_pred (1,C,ts,128), hm_tgt (1,C,ts,128),
#                     wh (1,4,ts,128), reg (1,5,ts,128)
#   output  (block) : (1, 1, 8, 128) per (image, spatial-split) partial sums:
#                     row 0 heatmap loss, row 1 pos count, row 2 box loss,
#                     row 3 box weight, rows 4-7 zero padding.
#   The output block is resident across the s axis and used as the accumulator.
# =============================================================================
def _fused_loss_kernel(hm_p_ref, hm_t_ref, wh_ref, reg_ref, out_ref,
                       *, W, s_rows, n_s_per, need_mask):
    p_idx = pl.program_id(1)
    s = pl.program_id(2)
    ts = hm_p_ref.shape[2]

    @pl.when(s == 0)
    def _():
        out_ref[...] = jnp.zeros_like(out_ref)

    tile = p_idx * n_s_per + s
    row_iota = lax.broadcasted_iota(jnp.int32, (ts, 128), 0)
    lane_iota = lax.broadcasted_iota(jnp.int32, (ts, 128), 1)
    row_ids = tile * ts + row_iota

    # ------------------- heatmap focal loss (alpha=2, beta=4) -------------------
    p = jnp.clip(hm_p_ref[0].astype(jnp.float32), 0.0001, 1.0 - 0.0001)   # (C,ts,128)
    t = hm_t_ref[0].astype(jnp.float32)
    pos_sel = t == 1.0
    neg_sel = t < 1.0
    one_m_p = 1.0 - p
    one_m_t = 1.0 - t
    omt2 = one_m_t * one_m_t
    pos_term = -jnp.log(p) * (one_m_p * one_m_p)
    neg_term = -jnp.log(one_m_p) * (p * p) * (omt2 * omt2)
    # pos/neg fused into one partial (wrapper only needs their sum)
    hm_loss_c = (jnp.where(pos_sel, pos_term, 0.0)
                 + jnp.where(neg_sel, neg_term, 0.0))
    hm_loss_sp = jnp.sum(hm_loss_c, axis=0)                     # (ts,128)
    pos_cnt_sp = jnp.sum(pos_sel.astype(jnp.float32), axis=0)   # (ts,128)

    # ------------------------------ CIoU box loss -------------------------------
    reg = reg_ref[0].astype(jnp.float32)                        # (5, ts, 128)
    w_raw = reg[4]
    box_sel = w_raw > 0.0

    if need_mask:
        # ragged last tile: mask hoisted to AFTER the channel reduction
        row_valid = row_ids < s_rows
        hm_loss_sp = jnp.where(row_valid, hm_loss_sp, 0.0)
        pos_cnt_sp = jnp.where(row_valid, pos_cnt_sp, 0.0)
        box_sel = jnp.logical_and(box_sel, row_valid)

    wgt = jnp.where(box_sel, w_raw, 0.0)
    # zero wh on non-positive points BEFORE exp so masked lanes stay finite
    whe = jnp.exp(jnp.where(box_sel[None], wh_ref[0], 0.0))     # (4, ts, 128)

    # feature-map coordinates generated in-kernel (no positions array from HBM)
    flat = row_ids * 128 + lane_iota
    pos_x, pos_y = _xy_from_flat(flat, W)

    st = jnp.float32(STRIDE)
    px1 = (pos_x - whe[0]) * st
    py1 = (pos_y - whe[1]) * st
    px2 = (pos_x + whe[2]) * st
    py2 = (pos_y + whe[3]) * st

    # safe dummy gt box on non-positive points (result masked out anyway)
    gx1 = jnp.where(box_sel, reg[0], 0.0)
    gy1 = jnp.where(box_sel, reg[1], 0.0)
    gx2 = jnp.where(box_sel, reg[2], 8.0)
    gy2 = jnp.where(box_sel, reg[3], 8.0)

    # IoU
    ox1 = jnp.maximum(px1, gx1)
    oy1 = jnp.maximum(py1, gy1)
    ox2 = jnp.minimum(px2, gx2)
    oy2 = jnp.minimum(py2, gy2)
    overlap = jnp.maximum(ox2 - ox1, 0.0) * jnp.maximum(oy2 - oy1, 0.0)
    pw = jnp.maximum(px2 - px1, 0.0)
    ph = jnp.maximum(py2 - py1, 0.0)
    gw = jnp.maximum(gx2 - gx1, 0.0)
    gh = jnp.maximum(gy2 - gy1, 0.0)
    union = jnp.maximum(pw * ph + gw * gh - overlap, 0.0001)
    ious = overlap * _rcp(union)

    # enclosing box / center distance
    ex1 = jnp.minimum(px1, gx1)
    ey1 = jnp.minimum(py1, gy1)
    ex2 = jnp.maximum(px2, gx2)
    ey2 = jnp.maximum(py2, gy2)
    ew = jnp.maximum(ex2 - ex1, 0.0)
    eh = jnp.maximum(ey2 - ey1, 0.0)
    c2 = jnp.maximum(ew * ew + eh * eh, 0.0001)

    dx = (px1 + px2) - (gx1 + gx2)
    dy = (py1 + py2) - (gy1 + gy2)
    p2 = 0.25 * (dx * dx + dy * dy)

    # aspect-ratio term with ONE arctan:
    #   atan(gw/gh) - atan(pw/ph) == atan((gw*ph - pw*gh) / (gh*ph + gw*pw))
    # (both ratios >= 0 so the product is >= 0; only d_atan^2 is used, so take abs)
    ar_num = jnp.abs(gw * ph - pw * gh)
    ar_den = jnp.maximum(gh * ph + gw * pw, 1e-20)
    d_atan = _atan_nonneg(ar_num * _rcp(ar_den))
    v = jnp.float32(4.0 / (math.pi ** 2)) * d_atan * d_atan
    alpha_c = v * _rcp(jnp.maximum(1.0 - ious + v, 0.0001))
    cious = ious - (p2 * _rcp(c2) + v * alpha_c)

    box_loss = jnp.where(box_sel, (1.0 - cious) * wgt, 0.0)

    # ---- sublane (XLU) reductions -> single (8,128) vreg RMW into resident out ----
    partial = jnp.concatenate(
        [jnp.sum(hm_loss_sp, axis=0, keepdims=True),
         jnp.sum(pos_cnt_sp, axis=0, keepdims=True),
         jnp.sum(box_loss, axis=0, keepdims=True),
         jnp.sum(wgt, axis=0, keepdims=True),
         jnp.zeros((4, 128), jnp.float32)], axis=0)
    out_ref[0, 0] = out_ref[0, 0] + partial


# =============================================================================
# Wrapper
# =============================================================================
def _round_up(x, m):
    return ((x + m - 1) // m) * m


def _vmem_budget():
    """(input double-buffer budget, vmem_limit_bytes), generation-aware."""
    try:
        cap = int(pltpu.get_tpu_info().vmem_capacity_bytes)
    except Exception:
        cap = 64 * 1024 * 1024
    if cap >= 100 * 1024 * 1024:            # v5e / v6e: 128 MiB VMEM
        return 40 * 1024 * 1024, 96 * 1024 * 1024
    return 20 * 1024 * 1024, 48 * 1024 * 1024   # v7x: 64 MiB VMEM per TC


def _pick_ts(C, S, budget_bytes):
    """Sublane-tile rows: fill the VMEM budget, cap at the ~512-row pipeline knee,
    and prefer a divisor of S so the ragged-tail mask can be dropped."""
    per_row = (2 * C + 9) * 128 * 4 * 2          # double-buffered input blocks
    per_row += (2 * C + 16) * 128 * 4            # headroom for live f32 intermediates
    ts = int(budget_bytes // per_row)
    ts = max(8, min(512, (ts // 8) * 8))
    if ts >= S:
        return S
    for cand in range(ts, max(ts // 2, 8) - 1, -8):
        if S % cand == 0:
            return cand
    return ts


def _fused_loss_sums(hm_pred, hm_tgt, wh_pred, reg_tgt, *, W, ts, n_par, n_s_per,
                     need_mask, vmem_limit):
    B, C, S, _ = hm_pred.shape
    kernel = functools.partial(_fused_loss_kernel, W=W, s_rows=S,
                               n_s_per=n_s_per, need_mask=need_mask)
    sidx = lambda b, p, s: (b, 0, p * n_s_per + s, 0)
    return pl.pallas_call(
        kernel,
        out_shape=jax.ShapeDtypeStruct((B, n_par, 8, 128), jnp.float32),
        grid_spec=pltpu.PrefetchScalarGridSpec(
            num_scalar_prefetch=0,
            grid=(B, n_par, n_s_per),
            in_specs=[pl.BlockSpec((1, C, ts, 128), sidx),
                      pl.BlockSpec((1, C, ts, 128), sidx),
                      pl.BlockSpec((1, 4, ts, 128), sidx),
                      pl.BlockSpec((1, 5, ts, 128), sidx)],
            out_specs=pl.BlockSpec((1, 1, 8, 128), lambda b, p, s: (b, p, 0, 0))),
        compiler_params=pltpu.CompilerParams(
            dimension_semantics=("parallel", "parallel", "arbitrary"),
            vmem_limit_bytes=vmem_limit),
    )(hm_pred, hm_tgt, wh_pred, reg_tgt)


def ttfnet_loss(heatmap_heads, wh_heads, annotations_np):
    """heatmap_heads: (B, num_classes, H, W) f32 in [0,1]; wh_heads: (B,4,H,W)."""
    B, C, H, W = heatmap_heads.shape
    HW = H * W
    HWp = _round_up(HW, 128)
    S = HWp // 128

    # ---- host glue: targets (data-dependent per-annotation control flow) ----
    hm_t, reg_t = get_batch_targets(C, H, W, annotations_np)

    def dev_layout(x):
        # (B, c, H, W) -> (B, c, S, 128): pure bitcast reshape when HW % 128 == 0
        x = jnp.asarray(x, jnp.float32).reshape(x.shape[0], x.shape[1], HW)
        if HWp != HW:
            # TODO(synk): rare path (HW not a multiple of 128) pays one pad copy.
            x = jnp.pad(x, ((0, 0), (0, 0), (0, HWp - HW)))
        return x.reshape(x.shape[0], x.shape[1], S, 128)

    def host_layout(x_np, pad_val):
        xb = x_np.reshape(x_np.shape[0], x_np.shape[1], HW)
        if HWp != HW:
            xb = np.pad(xb, ((0, 0), (0, 0), (0, HWp - HW)), constant_values=pad_val)
        return jnp.asarray(xb.reshape(xb.shape[0], xb.shape[1], S, 128),
                           dtype=TARGETS_DTYPE)

    hm_pred4 = dev_layout(heatmap_heads)
    wh_pred4 = dev_layout(wh_heads)
    hm_tgt4 = host_layout(hm_t, 2.0)      # pad target 2.0 -> neither pos nor neg
    reg_tgt4 = host_layout(reg_t, -1.0)   # pad weight <= 0 -> masked out

    in_budget, vmem_limit = _vmem_budget()
    ts = _pick_ts(C, S, in_budget)
    n_s = (S + ts - 1) // ts
    need_mask = (S % ts) != 0
    n_par = 2 if (n_s % 2 == 0) else 1    # megacore split of spatial axis (v7x)
    n_s_per = n_s // n_par

    part = _fused_loss_sums(hm_pred4, hm_tgt4, wh_pred4, reg_tgt4,
                            W=W, ts=ts, n_par=n_par, n_s_per=n_s_per,
                            need_mask=need_mask, vmem_limit=vmem_limit)
    totals = jnp.sum(part, axis=(0, 1, 3))   # (8,)
    hm_sum, pos_cnt = totals[0], totals[1]
    box_sum, w_sum = totals[2], totals[3]

    heatmap_loss = jnp.where(pos_cnt > 0.0,
                             hm_sum / jnp.maximum(pos_cnt, 1e-8),
                             0.0)
    box_loss = box_sum / (w_sum + 0.0001)

    return ({"heatmap_loss": HEATMAP_LOSS_WEIGHT * heatmap_loss,
             "box_loss": BOX_LOSS_WEIGHT * box_loss},
            (hm_t, reg_t))


# =============================================================================
# NumPy reference (for sanity checking the kernel)
# =============================================================================
def _ciou_np(b1, b2):
    ox1 = np.maximum(b1[:, 0], b2[:, 0]); oy1 = np.maximum(b1[:, 1], b2[:, 1])
    ox2 = np.minimum(b1[:, 2], b2[:, 2]); oy2 = np.minimum(b1[:, 3], b2[:, 3])
    ow = np.clip(ox2 - ox1, 0, None); oh = np.clip(oy2 - oy1, 0, None)
    overlap = ow * oh
    w1 = np.clip(b1[:, 2] - b1[:, 0], 0, None); h1 = np.clip(b1[:, 3] - b1[:, 1], 0, None)
    w2 = np.clip(b2[:, 2] - b2[:, 0], 0, None); h2 = np.clip(b2[:, 3] - b2[:, 1], 0, None)
    union = np.clip(w1 * h1 + w2 * h2 - overlap, 0.0001, None)
    ious = overlap / union
    ex1 = np.minimum(b1[:, 0], b2[:, 0]); ey1 = np.minimum(b1[:, 1], b2[:, 1])
    ex2 = np.maximum(b1[:, 2], b2[:, 2]); ey2 = np.maximum(b1[:, 3], b2[:, 3])
    ew = np.clip(ex2 - ex1, 0, None); eh = np.clip(ey2 - ey1, 0, None)
    c2 = np.clip(ew * ew + eh * eh, 0.0001, None)
    pcx = (b1[:, 0] + b1[:, 2]) / 2; pcy = (b1[:, 1] + b1[:, 3]) / 2
    gcx = (b2[:, 0] + b2[:, 2]) / 2; gcy = (b2[:, 1] + b2[:, 3]) / 2
    p2 = (pcx - gcx) ** 2 + (pcy - gcy) ** 2
    v = 4.0 / math.pi ** 2 * (np.arctan(w2 / h2) - np.arctan(w1 / h1)) ** 2
    alpha = v / np.clip(1 - ious + v, 0.0001, None)
    return ious - (p2 / c2 + v * alpha)


def reference_loss(hm_pred_nchw, wh_nchw, hm_t, reg_t):
    B, C, H, W = hm_pred_nchw.shape
    pos_hw = ttfnet_positions([W, H])                              # (H, W, 2)
    pos = np.broadcast_to(pos_hw[None], (B, H, W, 2)).reshape(-1, 2)
    hm_pred = np.transpose(hm_pred_nchw, (0, 2, 3, 1)).reshape(-1, C)
    wh = np.transpose(wh_nchw, (0, 2, 3, 1)).reshape(-1, 4)
    t = np.transpose(hm_t, (0, 2, 3, 1)).reshape(-1, C)
    reg = np.transpose(reg_t, (0, 2, 3, 1)).reshape(-1, 5)

    p = np.clip(hm_pred, 0.0001, 1.0 - 0.0001)
    pos_mask = t == 1.0
    neg_mask = t < 1.0
    pos_num = pos_mask.sum()
    if pos_num == 0:
        hm_loss = 0.0
    else:
        pl_ = (-np.log(p) * (1 - p) ** ALPHA * pos_mask).sum()
        nl_ = (-np.log(1 - p) * p ** ALPHA * (1 - t) ** BETA * neg_mask).sum()
        hm_loss = (pl_ + nl_) / pos_num

    whe = np.exp(wh)
    keep = reg[:, 4] > 0
    if keep.sum() == 0:
        box_loss = 0.0
    else:
        whk, posk, regk = whe[keep], pos[keep], reg[keep]
        pred = np.concatenate([(posk - whk[:, 0:2]) * STRIDE,
                               (posk + whk[:, 2:4]) * STRIDE], axis=1)
        ious = _ciou_np(pred, regk[:, 0:4])
        w = regk[:, 4]
        box_loss = ((1 - ious) * w).sum() / (w.sum() + 0.0001)
    return HEATMAP_LOSS_WEIGHT * hm_loss, BOX_LOSS_WEIGHT * box_loss


# =============================================================================
if __name__ == "__main__":
    B, num_classes, H, W = 2, 4, 16, 16        # feature map 16x16, stride 4 -> 64x64 image
    key = jax.random.PRNGKey(0)
    k1, k2 = jax.random.split(key)
    heatmap_heads = jax.nn.sigmoid(
        jax.random.normal(k1, (B, num_classes, H, W), jnp.float32))
    wh_heads = 0.5 * jax.random.normal(k2, (B, 4, H, W), jnp.float32)

    # annotations: (B, N, 5) = [x1, y1, x2, y2, class], -1 rows are padding
    annotations = np.array(
        [[[4.0, 6.0, 40.0, 44.0, 1.0],
          [10.0, 8.0, 30.0, 28.0, 3.0],
          [-1.0, -1.0, -1.0, -1.0, -1.0]],
         [[20.0, 16.0, 60.0, 56.0, 0.0],
          [2.0, 2.0, 22.0, 34.0, 2.0],
          [30.0, 30.0, 50.0, 60.0, 1.0]]], dtype=np.float32)

    loss_dict, (hm_t, reg_t) = ttfnet_loss(heatmap_heads, wh_heads, annotations)
    hm_loss = float(jax.block_until_ready(loss_dict["heatmap_loss"]))
    bx_loss = float(jax.block_until_ready(loss_dict["box_loss"]))

    ref_hm, ref_bx = reference_loss(np.asarray(heatmap_heads),
                                    np.asarray(wh_heads), hm_t, reg_t)

    assert np.isfinite(hm_loss) and np.isfinite(bx_loss)
    assert np.allclose(hm_loss, ref_hm, rtol=5e-3, atol=5e-4), (hm_loss, ref_hm)
    # box tolerance slightly looser: approx EUP reciprocal (no Newton step) in CIoU
    assert np.allclose(bx_loss, ref_bx, rtol=1e-2, atol=2e-3), (bx_loss, ref_bx)

    print("KERNEL_OK")
</pallas_src>

<mosaic_0001>
module attributes {stable_mosaic.version = 11 : i64} {
  func.func @_fused_loss_kernel(%arg0: i32, %arg1: i32, %arg2: i32, %arg3: memref<1x4x2x128xf32, #tpu.memory_space<vmem>>, %arg4: memref<1x4x2x128xf32, #tpu.memory_space<vmem>>, %arg5: memref<1x4x2x128xf32, #tpu.memory_space<vmem>>, %arg6: memref<1x5x2x128xf32, #tpu.memory_space<vmem>>, %arg7: memref<1x1x8x128xf32, #tpu.memory_space<vmem>>) attributes {dimension_semantics = [#tpu.dimension_semantics<parallel>, #tpu.dimension_semantics<parallel>, #tpu.dimension_semantics<arbitrary>], iteration_bounds = array<i64: 2, 1, 1>, scalar_prefetch = 0 : i64, scratch_operands = 0 : i64, tpu.core_type = #tpu.core_type<tc>, window_params = [{transform_indices = @transform_0, window_bounds = array<i64: 1, 4, 2, 128>}, {transform_indices = @transform_1, window_bounds = array<i64: 1, 4, 2, 128>}, {transform_indices = @transform_2, window_bounds = array<i64: 1, 4, 2, 128>}, {transform_indices = @transform_3, window_bounds = array<i64: 1, 5, 2, 128>}, {transform_indices = @transform_4, window_bounds = array<i64: 1, 1, 8, 128>}]} {
    %c0_i32 = arith.constant 0 : i32
    %0 = arith.cmpi eq, %arg2, %c0_i32 : i32
    %1 = arith.extui %0 : i1 to i32
    %c0_i32_0 = arith.constant 0 : i32
    %2 = arith.cmpi ne, %1, %c0_i32_0 : i32
    scf.if %2 {
      %cst_82 = arith.constant 0.000000e+00 : f32
      %252 = vector.broadcast %cst_82 : f32 to vector<1x1x8x128xf32>
      %c0_83 = arith.constant 0 : index
      %c0_84 = arith.constant 0 : index
      %c0_85 = arith.constant 0 : index
      %c0_86 = arith.constant 0 : index
      %253 = vector.load %arg7[%c0_83, %c0_84, %c0_85, %c0_86] : memref<1x1x8x128xf32, #tpu.memory_space<vmem>>, vector<1x1x8x128xf32>
      tpu.vector_store %arg7[%c0_83, %c0_84, %c0_85, %c0_86], %252 {strides = array<i32>} : memref<1x1x8x128xf32, #tpu.memory_space<vmem>>, vector<1x1x8x128xf32>,
    } else {
    }
    %c1_i32 = arith.constant 1 : i32
    %3 = arith.muli %arg1, %c1_i32 : i32
    %4 = arith.addi %3, %arg2 : i32
    %5 = tpu.iota {dimensions = array<i32: 0>} : vector<2x128xi32>
    %6 = tpu.iota {dimensions = array<i32: 1>} : vector<2x128xi32>
    %c2_i32 = arith.constant 2 : i32
    %7 = arith.muli %4, %c2_i32 : i32
    %8 = vector.broadcast %7 : i32 to vector<2x128xi32>
    %9 = arith.addi %8, %5 : vector<2x128xi32>
    %c0 = arith.constant 0 : index
    %c0_1 = arith.constant 0 : index
    %c0_2 = arith.constant 0 : index
    %c0_3 = arith.constant 0 : index
    %10 = vector.load %arg3[%c0, %c0_1, %c0_2, %c0_3] : memref<1x4x2x128xf32, #tpu.memory_space<vmem>>, vector<1x4x2x128xf32>
    %11 = vector.shape_cast %10 : vector<1x4x2x128xf32> to vector<4x2x128xf32>
    %cst = arith.constant 9.99999974E-5 : f32
    %cst_4 = arith.constant 0.999899983 : f32
    %12 = vector.broadcast %cst : f32 to vector<4x2x128xf32>
    %13 = arith.maximumf %12, %11 : vector<4x2x128xf32>
    %14 = vector.broadcast %cst_4 : f32 to vector<4x2x128xf32>
    %15 = arith.minimumf %14, %13 : vector<4x2x128xf32>
    %c0_5 = arith.constant 0 : index
    %c0_6 = arith.constant 0 : index
    %c0_7 = arith.constant 0 : index
    %c0_8 = arith.constant 0 : index
    %16 = vector.load %arg4[%c0_5, %c0_6, %c0_7, %c0_8] : memref<1x4x2x128xf32, #tpu.memory_space<vmem>>, vector<1x4x2x128xf32>
    %17 = vector.shape_cast %16 : vector<1x4x2x128xf32> to vector<4x2x128xf32>
    %cst_9 = arith.constant 1.000000e+00 : f32
    %18 = vector.broadcast %cst_9 : f32 to vector<4x2x128xf32>
    %19 = arith.cmpf oeq, %17, %18 : vector<4x2x128xf32>
    %cst_10 = arith.constant 1.000000e+00 : f32
    %20 = vector.broadcast %cst_10 : f32 to vector<4x2x128xf32>
    %21 = arith.cmpf olt, %17, %20 : vector<4x2x128xf32>
    %cst_11 = arith.constant 1.000000e+00 : f32
    %22 = vector.broadcast %cst_11 : f32 to vector<4x2x128xf32>
    %23 = arith.subf %22, %15 : vector<4x2x128xf32>
    %cst_12 = arith.constant 1.000000e+00 : f32
    %24 = vector.broadcast %cst_12 : f32 to vector<4x2x128xf32>
    %25 = arith.subf %24, %17 : vector<4x2x128xf32>
    %26 = arith.mulf %25, %25 : vector<4x2x128xf32>
    %27 = math.log %15 : vector<4x2x128xf32>
    %cst_13 = arith.constant 0.000000e+00 : f32
    %28 = vector.broadcast %cst_13 : f32 to vector<4x2x128xf32>
    %29 = arith.subf %28, %27 : vector<4x2x128xf32>
    %30 = arith.mulf %23, %23 : vector<4x2x128xf32>
    %31 = arith.mulf %29, %30 : vector<4x2x128xf32>
    %32 = math.log %23 : vector<4x2x128xf32>
    %cst_14 = arith.constant 0.000000e+00 : f32
    %33 = vector.broadcast %cst_14 : f32 to vector<4x2x128xf32>
    %34 = arith.subf %33, %32 : vector<4x2x128xf32>
    %35 = arith.mulf %15, %15 : vector<4x2x128xf32>
    %36 = arith.mulf %34, %35 : vector<4x2x128xf32>
    %37 = arith.mulf %26, %26 : vector<4x2x128xf32>
    %38 = arith.mulf %36, %37 : vector<4x2x128xf32>
    %cst_15 = arith.constant 0.000000e+00 : f32
    %39 = vector.broadcast %cst_15 : f32 to vector<4x2x128xf32>
    %40 = arith.select %19, %31, %39 : vector<4x2x128xi1>, vector<4x2x128xf32>
    %cst_16 = arith.constant 0.000000e+00 : f32
    %41 = vector.broadcast %cst_16 : f32 to vector<4x2x128xf32>
    %42 = arith.select %21, %38, %41 : vector<4x2x128xi1>, vector<4x2x128xf32>
    %43 = arith.addf %40, %42 : vector<4x2x128xf32>
    %cst_17 = arith.constant dense<0.000000e+00> : vector<2x128xf32>
    %44 = vector.multi_reduction <add>, %43, %cst_17 [0] : vector<4x2x128xf32> to vector<2x128xf32>
    %45 = arith.extui %19 : vector<4x2x128xi1> to vector<4x2x128xi32>
    %46 = arith.sitofp %45 : vector<4x2x128xi32> to vector<4x2x128xf32>
    %cst_18 = arith.constant dense<0.000000e+00> : vector<2x128xf32>
    %47 = vector.multi_reduction <add>, %46, %cst_18 [0] : vector<4x2x128xf32> to vector<2x128xf32>
    %c0_19 = arith.constant 0 : index
    %c0_20 = arith.constant 0 : index
    %c0_21 = arith.constant 0 : index
    %c0_22 = arith.constant 0 : index
    %48 = vector.load %arg6[%c0_19, %c0_20, %c0_21, %c0_22] : memref<1x5x2x128xf32, #tpu.memory_space<vmem>>, vector<1x5x2x128xf32>
    %49 = vector.shape_cast %48 : vector<1x5x2x128xf32> to vector<5x2x128xf32>
    %50 = vector.extract_strided_slice %49 {offsets = [4, 0, 0], sizes = [1, 2, 128], strides = [1, 1, 1]} : vector<5x2x128xf32> to vector<1x2x128xf32>
    %51 = vector.shape_cast %50 : vector<1x2x128xf32> to vector<2x128xf32>
    %cst_23 = arith.constant 0.000000e+00 : f32
    %52 = vector.broadcast %cst_23 : f32 to vector<2x128xf32>
    %53 = arith.cmpf ogt, %51, %52 : vector<2x128xf32>
    %cst_24 = arith.constant 0.000000e+00 : f32
    %54 = vector.broadcast %cst_24 : f32 to vector<2x128xf32>
    %55 = arith.select %53, %51, %54 : vector<2x128xi1>, vector<2x128xf32>
    %56 = vector.shape_cast %53 : vector<2x128xi1> to vector<1x2x128xi1>
    %c0_25 = arith.constant 0 : index
    %c0_26 = arith.constant 0 : index
    %c0_27 = arith.constant 0 : index
    %c0_28 = arith.constant 0 : index
    %57 = vector.load %arg5[%c0_25, %c0_26, %c0_27, %c0_28] : memref<1x4x2x128xf32, #tpu.memory_space<vmem>>, vector<1x4x2x128xf32>
    %58 = vector.shape_cast %57 : vector<1x4x2x128xf32> to vector<4x2x128xf32>
    %cst_29 = arith.constant 0.000000e+00 : f32
    %59 = vector.shape_cast %56 : vector<1x2x128xi1> to vector<1x2x128xi1>
    %60 = vector.broadcast %59 : vector<1x2x128xi1> to vector<4x2x128xi1>
    %61 = vector.broadcast %cst_29 : f32 to vector<4x2x128xf32>
    %62 = arith.select %60, %58, %61 : vector<4x2x128xi1>, vector<4x2x128xf32>
    %63 = math.exp %62 : vector<4x2x128xf32>
    %c128_i32 = arith.constant 128 : i32
    %64 = vector.broadcast %c128_i32 : i32 to vector<2x128xi32>
    %65 = arith.muli %9, %64 : vector<2x128xi32>
    %66 = arith.addi %65, %6 : vector<2x128xi32>
    %c4_i32 = arith.constant 4 : i32
    %67 = vector.broadcast %c4_i32 : i32 to vector<2x128xi32>
    %68 = arith.shrsi %66, %67 : vector<2x128xi32>
    %69 = arith.sitofp %68 : vector<2x128xi32> to vector<2x128xf32>
    %c15_i32 = arith.constant 15 : i32
    %70 = vector.broadcast %c15_i32 : i32 to vector<2x128xi32>
    %71 = arith.andi %66, %70 : vector<2x128xi32>
    %72 = arith.sitofp %71 : vector<2x128xi32> to vector<2x128xf32>
    %73 = vector.extract_strided_slice %63 {offsets = [0, 0, 0], sizes = [1, 2, 128], strides = [1, 1, 1]} : vector<4x2x128xf32> to vector<1x2x128xf32>
    %74 = vector.shape_cast %73 : vector<1x2x128xf32> to vector<2x128xf32>
    %75 = arith.subf %72, %74 : vector<2x128xf32>
    %cst_30 = arith.constant 4.000000e+00 : f32
    %76 = vector.broadcast %cst_30 : f32 to vector<2x128xf32>
    %77 = arith.mulf %75, %76 : vector<2x128xf32>
    %78 = vector.extract_strided_slice %63 {offsets = [1, 0, 0], sizes = [1, 2, 128], strides = [1, 1, 1]} : vector<4x2x128xf32> to vector<1x2x128xf32>
    %79 = vector.shape_cast %78 : vector<1x2x128xf32> to vector<2x128xf32>
    %80 = arith.subf %69, %79 : vector<2x128xf32>
    %cst_31 = arith.constant 4.000000e+00 : f32
    %81 = vector.broadcast %cst_31 : f32 to vector<2x128xf32>
    %82 = arith.mulf %80, %81 : vector<2x128xf32>
    %83 = vector.extract_strided_slice %63 {offsets = [2, 0, 0], sizes = [1, 2, 128], strides = [1, 1, 1]} : vector<4x2x128xf32> to vector<1x2x128xf32>
    %84 = vector.shape_cast %83 : vector<1x2x128xf32> to vector<2x128xf32>
    %85 = arith.addf %72, %84 : vector<2x128xf32>
    %cst_32 = arith.constant 4.000000e+00 : f32
    %86 = vector.broadcast %cst_32 : f32 to vector<2x128xf32>
    %87 = arith.mulf %85, %86 : vector<2x128xf32>
    %88 = vector.extract_strided_slice %63 {offsets = [3, 0, 0], sizes = [1, 2, 128], strides = [1, 1, 1]} : vector<4x2x128xf32> to vector<1x2x128xf32>
    %89 = vector.shape_cast %88 : vector<1x2x128xf32> to vector<2x128xf32>
    %90 = arith.addf %69, %89 : vector<2x128xf32>
    %cst_33 = arith.constant 4.000000e+00 : f32
    %91 = vector.broadcast %cst_33 : f32 to vector<2x128xf32>
    %92 = arith.mulf %90, %91 : vector<2x128xf32>
    %93 = vector.extract_strided_slice %49 {offsets = [0, 0, 0], sizes = [1, 2, 128], strides = [1, 1, 1]} : vector<5x2x128xf32> to vector<1x2x128xf32>
    %94 = vector.shape_cast %93 : vector<1x2x128xf32> to vector<2x128xf32>
    %cst_34 = arith.constant 0.000000e+00 : f32
    %95 = vector.broadcast %cst_34 : f32 to vector<2x128xf32>
    %96 = arith.select %53, %94, %95 : vector<2x128xi1>, vector<2x128xf32>
    %97 = vector.extract_strided_slice %49 {offsets = [1, 0, 0], sizes = [1, 2, 128], strides = [1, 1, 1]} : vector<5x2x128xf32> to vector<1x2x128xf32>
    %98 = vector.shape_cast %97 : vector<1x2x128xf32> to vector<2x128xf32>
    %cst_35 = arith.constant 0.000000e+00 : f32
    %99 = vector.broadcast %cst_35 : f32 to vector<2x128xf32>
    %100 = arith.select %53, %98, %99 : vector<2x128xi1>, vector<2x128xf32>
    %101 = vector.extract_strided_slice %49 {offsets = [2, 0, 0], sizes = [1, 2, 128], strides = [1, 1, 1]} : vector<5x2x128xf32> to vector<1x2x128xf32>
    %102 = vector.shape_cast %101 : vector<1x2x128xf32> to vector<2x128xf32>
    %cst_36 = arith.constant 8.000000e+00 : f32
    %103 = vector.broadcast %cst_36 : f32 to vector<2x128xf32>
    %104 = arith.select %53, %102, %103 : vector<2x128xi1>, vector<2x128xf32>
    %105 = vector.extract_strided_slice %49 {offsets = [3, 0, 0], sizes = [1, 2, 128], strides = [1, 1, 1]} : vector<5x2x128xf32> to vector<1x2x128xf32>
    %106 = vector.shape_cast %105 : vector<1x2x128xf32> to vector<2x128xf32>
    %cst_37 = arith.constant 8.000000e+00 : f32
    %107 = vector.broadcast %cst_37 : f32 to vector<2x128xf32>
    %108 = arith.select %53, %106, %107 : vector<2x128xi1>, vector<2x128xf32>
    %109 = arith.maximumf %77, %96 : vector<2x128xf32>
    %110 = arith.maximumf %82, %100 : vector<2x128xf32>
    %111 = arith.minimumf %87, %104 : vector<2x128xf32>
    %112 = arith.minimumf %92, %108 : vector<2x128xf32>
    %113 = arith.subf %111, %109 : vector<2x128xf32>
    %cst_38 = arith.constant 0.000000e+00 : f32
    %114 = vector.broadcast %cst_38 : f32 to vector<2x128xf32>
    %115 = arith.maximumf %113, %114 : vector<2x128xf32>
    %116 = arith.subf %112, %110 : vector<2x128xf32>
    %cst_39 = arith.constant 0.000000e+00 : f32
    %117 = vector.broadcast %cst_39 : f32 to vector<2x128xf32>
    %118 = arith.maximumf %116, %117 : vector<2x128xf32>
    %119 = arith.mulf %115, %118 : vector<2x128xf32>
    %120 = arith.subf %87, %77 : vector<2x128xf32>
    %cst_40 = arith.constant 0.000000e+00 : f32
    %121 = vector.broadcast %cst_40 : f32 to vector<2x128xf32>
    %122 = arith.maximumf %120, %121 : vector<2x128xf32>
    %123 = arith.subf %92, %82 : vector<2x128xf32>
    %cst_41 = arith.constant 0.000000e+00 : f32
    %124 = vector.broadcast %cst_41 : f32 to vector<2x128xf32>
    %125 = arith.maximumf %123, %124 : vector<2x128xf32>
    %126 = arith.subf %104, %96 : vector<2x128xf32>
    %cst_42 = arith.constant 0.000000e+00 : f32
    %127 = vector.broadcast %cst_42 : f32 to vector<2x128xf32>
    %128 = arith.maximumf %126, %127 : vector<2x128xf32>
    %129 = arith.subf %108, %100 : vector<2x128xf32>
    %cst_43 = arith.constant 0.000000e+00 : f32
    %130 = vector.broadcast %cst_43 : f32 to vector<2x128xf32>
    %131 = arith.maximumf %129, %130 : vector<2x128xf32>
    %132 = arith.mulf %122, %125 : vector<2x128xf32>
    %133 = arith.mulf %128, %131 : vector<2x128xf32>
    %134 = arith.addf %132, %133 : vector<2x128xf32>
    %135 = arith.subf %134, %119 : vector<2x128xf32>
    %cst_44 = arith.constant 9.99999974E-5 : f32
    %136 = vector.broadcast %cst_44 : f32 to vector<2x128xf32>
    %137 = arith.maximumf %135, %136 : vector<2x128xf32>
    %138 = tpu.reciprocal %137 {approx = true} : vector<2x128xf32> -> vector<2x128xf32>
    %139 = arith.mulf %119, %138 : vector<2x128xf32>
    %140 = arith.minimumf %77, %96 : vector<2x128xf32>
    %141 = arith.minimumf %82, %100 : vector<2x128xf32>
    %142 = arith.maximumf %87, %104 : vector<2x128xf32>
    %143 = arith.maximumf %92, %108 : vector<2x128xf32>
    %144 = arith.subf %142, %140 : vector<2x128xf32>
    %cst_45 = arith.constant 0.000000e+00 : f32
    %145 = vector.broadcast %cst_45 : f32 to vector<2x128xf32>
    %146 = arith.maximumf %144, %145 : vector<2x128xf32>
    %147 = arith.subf %143, %141 : vector<2x128xf32>
    %cst_46 = arith.constant 0.000000e+00 : f32
    %148 = vector.broadcast %cst_46 : f32 to vector<2x128xf32>
    %149 = arith.maximumf %147, %148 : vector<2x128xf32>
    %150 = arith.mulf %146, %146 : vector<2x128xf32>
    %151 = arith.mulf %149, %149 : vector<2x128xf32>
    %152 = arith.addf %150, %151 : vector<2x128xf32>
    %cst_47 = arith.constant 9.99999974E-5 : f32
    %153 = vector.broadcast %cst_47 : f32 to vector<2x128xf32>
    %154 = arith.maximumf %152, %153 : vector<2x128xf32>
    %155 = arith.addf %77, %87 : vector<2x128xf32>
    %156 = arith.addf %96, %104 : vector<2x128xf32>
    %157 = arith.subf %155, %156 : vector<2x128xf32>
    %158 = arith.addf %82, %92 : vector<2x128xf32>
    %159 = arith.addf %100, %108 : vector<2x128xf32>
    %160 = arith.subf %158, %159 : vector<2x128xf32>
    %161 = arith.mulf %157, %157 : vector<2x128xf32>
    %162 = arith.mulf %160, %160 : vector<2x128xf32>
    %163 = arith.addf %161, %162 : vector<2x128xf32>
    %cst_48 = arith.constant 2.500000e-01 : f32
    %164 = vector.broadcast %cst_48 : f32 to vector<2x128xf32>
    %165 = arith.mulf %164, %163 : vector<2x128xf32>
    %166 = arith.mulf %128, %125 : vector<2x128xf32>
    %167 = arith.mulf %122, %131 : vector<2x128xf32>
    %168 = arith.subf %166, %167 : vector<2x128xf32>
    %169 = math.absf %168 : vector<2x128xf32>
    %170 = arith.mulf %131, %125 : vector<2x128xf32>
    %171 = arith.mulf %128, %122 : vector<2x128xf32>
    %172 = arith.addf %170, %171 : vector<2x128xf32>
    %cst_49 = arith.constant 9.99999968E-21 : f32
    %173 = vector.broadcast %cst_49 : f32 to vector<2x128xf32>
    %174 = arith.maximumf %172, %173 : vector<2x128xf32>
    %175 = tpu.reciprocal %174 {approx = true} : vector<2x128xf32> -> vector<2x128xf32>
    %176 = arith.mulf %169, %175 : vector<2x128xf32>
    %cst_50 = arith.constant 2.41421366 : f32
    %177 = vector.broadcast %cst_50 : f32 to vector<2x128xf32>
    %178 = arith.cmpf ogt, %176, %177 : vector<2x128xf32>
    %cst_51 = arith.constant 0.414213568 : f32
    %179 = vector.broadcast %cst_51 : f32 to vector<2x128xf32>
    %180 = arith.cmpf ogt, %176, %179 : vector<2x128xf32>
    %cst_52 = arith.constant dense<true> : vector<2x128xi1>
    %181 = arith.xori %178, %cst_52 : vector<2x128xi1>
    %182 = arith.andi %180, %181 : vector<2x128xi1>
    %cst_53 = arith.constant 1.000000e-30 : f32
    %183 = vector.broadcast %cst_53 : f32 to vector<2x128xf32>
    %184 = arith.maximumf %176, %183 : vector<2x128xf32>
    %185 = tpu.reciprocal %184 {approx = true} : vector<2x128xf32> -> vector<2x128xf32>
    %cst_54 = arith.constant 0.000000e+00 : f32
    %186 = vector.broadcast %cst_54 : f32 to vector<2x128xf32>
    %187 = arith.subf %186, %185 : vector<2x128xf32>
    %cst_55 = arith.constant 1.000000e+00 : f32
    %188 = vector.broadcast %cst_55 : f32 to vector<2x128xf32>
    %189 = arith.subf %176, %188 : vector<2x128xf32>
    %cst_56 = arith.constant 1.000000e+00 : f32
    %190 = vector.broadcast %cst_56 : f32 to vector<2x128xf32>
    %191 = arith.addf %176, %190 : vector<2x128xf32>
    %192 = tpu.reciprocal %191 {approx = true} : vector<2x128xf32> -> vector<2x128xf32>
    %193 = arith.mulf %189, %192 : vector<2x128xf32>
    %194 = arith.select %182, %193, %176 : vector<2x128xi1>, vector<2x128xf32>
    %195 = arith.select %178, %187, %194 : vector<2x128xi1>, vector<2x128xf32>
    %cst_57 = arith.constant 0.785398185 : f32
    %cst_58 = arith.constant 0.000000e+00 : f32
    %196 = vector.broadcast %cst_57 : f32 to vector<2x128xf32>
    %197 = vector.broadcast %cst_58 : f32 to vector<2x128xf32>
    %198 = arith.select %182, %196, %197 : vector<2x128xi1>, vector<2x128xf32>
    %cst_59 = arith.constant 1.57079637 : f32
    %199 = vector.broadcast %cst_59 : f32 to vector<2x128xf32>
    %200 = arith.select %178, %199, %198 : vector<2x128xi1>, vector<2x128xf32>
    %201 = arith.mulf %195, %195 : vector<2x128xf32>
    %cst_60 = arith.constant 0.0805374458 : f32
    %202 = vector.broadcast %cst_60 : f32 to vector<2x128xf32>
    %203 = arith.mulf %202, %201 : vector<2x128xf32>
    %cst_61 = arith.constant 0.138776854 : f32
    %204 = vector.broadcast %cst_61 : f32 to vector<2x128xf32>
    %205 = arith.subf %203, %204 : vector<2x128xf32>
    %206 = arith.mulf %205, %201 : vector<2x128xf32>
    %cst_62 = arith.constant 0.199777111 : f32
    %207 = vector.broadcast %cst_62 : f32 to vector<2x128xf32>
    %208 = arith.addf %206, %207 : vector<2x128xf32>
    %209 = arith.mulf %208, %201 : vector<2x128xf32>
    %cst_63 = arith.constant 0.333329499 : f32
    %210 = vector.broadcast %cst_63 : f32 to vector<2x128xf32>
    %211 = arith.subf %209, %210 : vector<2x128xf32>
    %212 = arith.mulf %211, %201 : vector<2x128xf32>
    %213 = arith.mulf %212, %195 : vector<2x128xf32>
    %214 = arith.addf %213, %195 : vector<2x128xf32>
    %215 = arith.addf %200, %214 : vector<2x128xf32>
    %cst_64 = arith.constant 0.405284733 : f32
    %216 = vector.broadcast %cst_64 : f32 to vector<2x128xf32>
    %217 = arith.mulf %216, %215 : vector<2x128xf32>
    %218 = arith.mulf %217, %215 : vector<2x128xf32>
    %cst_65 = arith.constant 1.000000e+00 : f32
    %219 = vector.broadcast %cst_65 : f32 to vector<2x128xf32>
    %220 = arith.subf %219, %139 : vector<2x128xf32>
    %221 = arith.addf %220, %218 : vector<2x128xf32>
    %cst_66 = arith.constant 9.99999974E-5 : f32
    %222 = vector.broadcast %cst_66 : f32 to vector<2x128xf32>
    %223 = arith.maximumf %221, %222 : vector<2x128xf32>
    %224 = tpu.reciprocal %223 {approx = true} : vector<2x128xf32> -> vector<2x128xf32>
    %225 = arith.mulf %218, %224 : vector<2x128xf32>
    %226 = tpu.reciprocal %154 {approx = true} : vector<2x128xf32> -> vector<2x128xf32>
    %227 = arith.mulf %165, %226 : vector<2x128xf32>
    %228 = arith.mulf %218, %225 : vector<2x128xf32>
    %229 = arith.addf %227, %228 : vector<2x128xf32>
    %230 = arith.subf %139, %229 : vector<2x128xf32>
    %cst_67 = arith.constant 1.000000e+00 : f32
    %231 = vector.broadcast %cst_67 : f32 to vector<2x128xf32>
    %232 = arith.subf %231, %230 : vector<2x128xf32>
    %233 = arith.mulf %232, %55 : vector<2x128xf32>
    %cst_68 = arith.constant 0.000000e+00 : f32
    %234 = vector.broadcast %cst_68 : f32 to vector<2x128xf32>
    %235 = arith.select %53, %233, %234 : vector<2x128xi1>, vector<2x128xf32>
    %cst_69 = arith.constant dense<0.000000e+00> : vector<128xf32>
    %236 = vector.multi_reduction <add>, %44, %cst_69 [0] : vector<2x128xf32> to vector<128xf32>
    %237 = vector.shape_cast %236 : vector<128xf32> to vector<1x128xf32>
    %cst_70 = arith.constant dense<0.000000e+00> : vector<128xf32>
    %238 = vector.multi_reduction <add>, %47, %cst_70 [0] : vector<2x128xf32> to vector<128xf32>
    %239 = vector.shape_cast %238 : vector<128xf32> to vector<1x128xf32>
    %cst_71 = arith.constant dense<0.000000e+00> : vector<128xf32>
    %240 = vector.multi_reduction <add>, %235, %cst_71 [0] : vector<2x128xf32> to vector<128xf32>
    %241 = vector.shape_cast %240 : vector<128xf32> to vector<1x128xf32>
    %cst_72 = arith.constant dense<0.000000e+00> : vector<128xf32>
    %242 = vector.multi_reduction <add>, %55, %cst_72 [0] : vector<2x128xf32> to vector<128xf32>
    %243 = vector.shape_cast %242 : vector<128xf32> to vector<1x128xf32>
    %cst_73 = arith.constant 0.000000e+00 : f32
    %244 = vector.broadcast %cst_73 : f32 to vector<4x128xf32>
    %245 = tpu.concatenate %237, %239, %241, %243, %244 in 0 : vector<1x128xf32>, vector<1x128xf32>, vector<1x128xf32>, vector<1x128xf32>, vector<4x128xf32> -> vector<8x128xf32>
    %c0_74 = arith.constant 0 : index
    %c0_75 = arith.constant 0 : index
    %c0_76 = arith.constant 0 : index
    %c0_77 = arith.constant 0 : index
    %246 = vector.load %arg7[%c0_74, %c0_75, %c0_76, %c0_77] : memref<1x1x8x128xf32, #tpu.memory_space<vmem>>, vector<1x1x8x128xf32>
    %247 = vector.shape_cast %246 : vector<1x1x8x128xf32> to vector<8x128xf32>
    %248 = arith.addf %247, %245 : vector<8x128xf32>
    %c0_78 = arith.constant 0 : index
    %c0_79 = arith.constant 0 : index
    %c0_80 = arith.constant 0 : index
    %c0_81 = arith.constant 0 : index
    %249 = vector.load %arg7[%c0_78, %c0_79, %c0_80, %c0_81] : memref<1x1x8x128xf32, #tpu.memory_space<vmem>>, vector<1x1x8x128xf32>
    %250 = vector.shape_cast %249 : vector<1x1x8x128xf32> to vector<8x128xf32>
    %251 = vector.shape_cast %248 : vector<8x128xf32> to vector<1x1x8x128xf32>
    tpu.vector_store %arg7[%c0_78, %c0_79, %c0_80, %c0_81], %251 {strides = array<i32>} : memref<1x1x8x128xf32, #tpu.memory_space<vmem>>, vector<1x1x8x128xf32>,
    return
  }
  func.func @transform_0(%arg0: i32, %arg1: i32, %arg2: i32) -> (i32, i32, i32, i32) {
    %c1_i32 = arith.constant 1 : i32
    %0 = arith.muli %arg1, %c1_i32 : i32
    %1 = arith.addi %0, %arg2 : i32
    %c0_i32 = arith.constant 0 : i32
    %c0_i32_0 = arith.constant 0 : i32
    %c0_i32_1 = arith.constant 0 : i32
    return %arg0, %c0_i32, %1, %c0_i32_0 : i32, i32, i32, i32
  }
  func.func @transform_1(%arg0: i32, %arg1: i32, %arg2: i32) -> (i32, i32, i32, i32) {
    %c1_i32 = arith.constant 1 : i32
    %0 = arith.muli %arg1, %c1_i32 : i32
    %1 = arith.addi %0, %arg2 : i32
    %c0_i32 = arith.constant 0 : i32
    %c0_i32_0 = arith.constant 0 : i32
    %c0_i32_1 = arith.constant 0 : i32
    return %arg0, %c0_i32, %1, %c0_i32_0 : i32, i32, i32, i32
  }
  func.func @transform_2(%arg0: i32, %arg1: i32, %arg2: i32) -> (i32, i32, i32, i32) {
    %c1_i32 = arith.constant 1 : i32
    %0 = arith.muli %arg1, %c1_i32 : i32
    %1 = arith.addi %0, %arg2 : i32
    %c0_i32 = arith.constant 0 : i32
    %c0_i32_0 = arith.constant 0 : i32
    %c0_i32_1 = arith.constant 0 : i32
    return %arg0, %c0_i32, %1, %c0_i32_0 : i32, i32, i32, i32
  }
  func.func @transform_3(%arg0: i32, %arg1: i32, %arg2: i32) -> (i32, i32, i32, i32) {
    %c1_i32 = arith.constant 1 : i32
    %0 = arith.muli %arg1, %c1_i32 : i32
    %1 = arith.addi %0, %arg2 : i32
    %c0_i32 = arith.constant 0 : i32
    %c0_i32_0 = arith.constant 0 : i32
    %c0_i32_1 = arith.constant 0 : i32
    return %arg0, %c0_i32, %1, %c0_i32_0 : i32, i32, i32, i32
  }
  func.func @transform_4(%arg0: i32, %arg1: i32, %arg2: i32) -> (i32, i32, i32, i32) {
    %c0_i32 = arith.constant 0 : i32
    %c0_i32_0 = arith.constant 0 : i32
    %c0_i32_1 = arith.constant 0 : i32
    return %arg0, %arg1, %c0_i32, %c0_i32_0 : i32, i32, i32, i32
  }
}

</mosaic_0001>

<llo_original>
// kernel: tpu_custom_call.1
$region0: #{tpu_custom_call.1}
  #allocation0 [shape = 'u32[]', space=smem, size = 0x4, offset = 0x4, fixed_abs, tag = 'smem constant byte address 0x4 - core index']
  #allocation1 [shape = 'u32[144,128]{1,0:T(1,128)}', space=vmem, size = 0x12000, scoped, tag = 'internal scratch']
  %s0 = inlined_call_operand.hbm [shape: f32[2,4,2,128], index: 0, kind: input, shape index: {}]
  %s1 = inlined_call_operand.hbm [shape: f32[2,4,2,128], index: 1, kind: input, shape index: {}]
  %s2 = inlined_call_operand.hbm [shape: f32[2,4,2,128], index: 2, kind: input, shape index: {}]
  %s3 = inlined_call_operand.hbm [shape: f32[2,5,2,128], index: 3, kind: input, shape index: {}]
  %s4 = inlined_call_operand.hbm [shape: f32[2,1,8,128], index: 4, kind: output, shape index: {}]
  %s5 = sld [smem:[#allocation0]]
  $region69: #{tpu_custom_call.1} parent=0
    _
  %s7 = ssub.s32 1, %s5
  %s8 = scalar_select 0, %s7, %s5
  $region1: #{tpu_custom_call.1} parent=0
    #allocation2 [shape = 'u8[8192]{0}', space=vmem, size = 0x2000, scoped, tag = 'input window, operand 0']
    #allocation3 [shape = 's32[2]{0}', space=sflag, size = 0x8, scoped, tag = 'scoped memory for tpu_custom_call.1']
    #allocation4 [shape = 's32[2]{0}', space=sflag, size = 0x8, scoped, tag = 'scoped memory for tpu_custom_call.1']
    #allocation5 [shape = 'u8[8192]{0}', space=vmem, size = 0x2000, scoped, tag = 'input window, operand 1']
    #allocation6 [shape = 's32[2]{0}', space=sflag, size = 0x8, scoped, tag = 'scoped memory for tpu_custom_call.1']
    #allocation7 [shape = 'u8[8192]{0}', space=vmem, size = 0x2000, scoped, tag = 'input window, operand 2']
    #allocation8 [shape = 'u8[10240]{0}', space=vmem, size = 0x2800, scoped, tag = 'input window, operand 3']
    #allocation9 [shape = 's32[2]{0}', space=sflag, size = 0x8, scoped, tag = 'scoped memory for tpu_custom_call.1']
    #allocation10 [shape = 'u8[8192]{0}', space=vmem, size = 0x2000, scoped, tag = 'output window, operand 0']
    %9 = vsyncpa [#allocation3], 0
    %s10 = scalar_lea.sflag [#allocation3], 1
    %11 = vsyncpa %s10, 0
    %12 = vsyncpa [#allocation6], 0
    %s13 = scalar_lea.sflag [#allocation6], 1
    %14 = vsyncpa %s13, 0
    %15 = vsyncpa [#allocation9], 0
    %s16 = scalar_lea.sflag [#allocation9], 1
    %17 = vsyncpa %s16, 0
    %18 = vsyncpa [#allocation4], 0
    %s19 = scalar_lea.sflag [#allocation4], 1
    %20 = vsyncpa %s19, 0
    loop: start=0, step=1, limit=4
    $region2: #{tpu_custom_call.1} parent=1 // loop_pre_header
      _
    $region3: #{tpu_custom_call.1} parent=1 // loop_header
      %s22 = sphi 0, %s26
      %p23 = scmp.ge.s32.totalorder %s22, 4
      %s29 = sphi 0, %s48
      %s30 = sphi 0, %s44
      %s31 = sphi 0, %s40
      %s32 = sphi 0, %s29
      %s33 = sphi 0, %s30
      %s34 = sphi 0, %s31
      %s35 = sphi 0, %s32
      %s36 = sphi 0, %s33
      %s37 = sphi 0, %s34
      %s55 = sphi 0, %s57
      %s58 = sphi 0, %s55
      %s59 = sphi 0, %s58
      %s75 = sphi 0, %s59
      %s85 = sphi 0, %s87
      %s88 = sphi 0, %s85
      %s89 = sphi 0, %s88
      %s105 = sphi 0, %s89
      %s115 = sphi 0, %s117
      %s118 = sphi 0, %s115
      %s119 = sphi 0, %s118
      %s135 = sphi 0, %s119
      %s145 = sphi 0, %s147
      %s148 = sphi 0, %s145
      %s149 = sphi 0, %s148
      %s165 = sphi 0, %s149
      %s173 = sphi 0, %s175
      %s176 = sphi 0, %s173
      %s177 = sphi 0, %s176
      %s193 = sphi 0, %s177
    $region4: #{tpu_custom_call.1} parent=1 // loop_header_branch
      %25 = sbr.rel (%p23) target = $region8
    $region5: #{tpu_custom_call.1} parent=1 // loop_body
      %s27 = ssub.s32 %s22, 1
      %s28 = ssub.s32 %s22, 2
      %s38 = sadd.s32 1, %s31
      %p39 = scmp.ge.s32.totalorder %s38, 1
      %s40 = scalar_select %p39, 0, %s38
      %s41 = sadd.s32 1, %s30
      %s42 = scalar_select %p39, %s41, %s30
      %p43 = scmp.ge.s32.totalorder %s42, 1
      %s44 = scalar_select %p43, 0, %s42
      %s45 = sadd.s32 1, %s29
      %s46 = scalar_select %p43, %s45, %s29
      %p47 = scmp.ge.s32.totalorder %s46, 2
      %s48 = scalar_select %p47, 0, %s46
      %s49 = sadd.s32 %s30, %s31
      %s50 = sadd.s32 %s44, %s40
      %s51 = ssub.s32 %s29, %s48
      %s52 = ssub.s32 %s49, %s50
      %s53 = sor.u32 %s51, %s52
      %p54 = scmp.eq.s32.totalorder %s53, 0
      %s56 = sadd.s32 %s55, 1
      %s57 = scalar_select %p54, %s55, %s56
      %p60 = pneg %p54
      %p61 = scmp.eq.s32.totalorder %s22, 1
      %p62 = por %p60, %p61
      %p63 = scmp.ne.s32.totalorder %s55, %s58
      %p64 = scmp.eq.s32.totalorder %s22, 0
      %p65 = por %p63, %p64
      %p66 = scmp.ne.s32.totalorder %s55, %s58
      %p67 = scmp.eq.s32.totalorder %s27, 1
      %p68 = por %p66, %p67
      %p69 = scmp.ne.s32.totalorder %s58, %s59
      %p70 = scmp.eq.s32.totalorder %s27, 0
      %p71 = por %p69, %p70
      %p72 = scmp.ne.s32.totalorder %s58, %s59
      %p73 = scmp.eq.s32.totalorder %s28, 1
      %p74 = por %p72, %p73
      %p76 = scmp.ne.s32.totalorder %s59, %s75
      %p77 = scmp.eq.s32.totalorder %s28, 0
      %p78 = por %p76, %p77
      %s79 = sadd.s32 %s30, %s31
      %s80 = sadd.s32 %s44, %s40
      %s81 = ssub.s32 %s29, %s48
      %s82 = ssub.s32 %s79, %s80
      %s83 = sor.u32 %s81, %s82
      %p84 = scmp.eq.s32.totalorder %s83, 0
      %s86 = sadd.s32 %s85, 1
      %s87 = scalar_select %p84, %s85, %s86
      %p90 = pneg %p84
      %p91 = scmp.eq.s32.totalorder %s22, 1
      %p92 = por %p90, %p91
      %p93 = scmp.ne.s32.totalorder %s85, %s88
      %p94 = scmp.eq.s32.totalorder %s22, 0
      %p95 = por %p93, %p94
      %p96 = scmp.ne.s32.totalorder %s85, %s88
      %p97 = scmp.eq.s32.totalorder %s27, 1
      %p98 = por %p96, %p97
      %p99 = scmp.ne.s32.totalorder %s88, %s89
      %p100 = scmp.eq.s32.totalorder %s27, 0
      %p101 = por %p99, %p100
      %p102 = scmp.ne.s32.totalorder %s88, %s89
      %p103 = scmp.eq.s32.totalorder %s28, 1
      %p104 = por %p102, %p103
      %p106 = scmp.ne.s32.totalorder %s89, %s105
      %p107 = scmp.eq.s32.totalorder %s28, 0
      %p108 = por %p106, %p107
      %s109 = sadd.s32 %s30, %s31
      %s110 = sadd.s32 %s44, %s40
      %s111 = ssub.s32 %s29, %s48
      %s112 = ssub.s32 %s109, %s110
      %s113 = sor.u32 %s111, %s112
      %p114 = scmp.eq.s32.totalorder %s113, 0
      %s116 = sadd.s32 %s115, 1
      %s117 = scalar_select %p114, %s115, %s116
      %p120 = pneg %p114
      %p121 = scmp.eq.s32.totalorder %s22, 1
      %p122 = por %p120, %p121
      %p123 = scmp.ne.s32.totalorder %s115, %s118
      %p124 = scmp.eq.s32.totalorder %s22, 0
      %p125 = por %p123, %p124
      %p126 = scmp.ne.s32.totalorder %s115, %s118
      %p127 = scmp.eq.s32.totalorder %s27, 1
      %p128 = por %p126, %p127
      %p129 = scmp.ne.s32.totalorder %s118, %s119
      %p130 = scmp.eq.s32.totalorder %s27, 0
      %p131 = por %p129, %p130
      %p132 = scmp.ne.s32.totalorder %s118, %s119
      %p133 = scmp.eq.s32.totalorder %s28, 1
      %p134 = por %p132, %p133
      %p136 = scmp.ne.s32.totalorder %s119, %s135
      %p137 = scmp.eq.s32.totalorder %s28, 0
      %p138 = por %p136, %p137
      %s139 = sadd.s32 %s30, %s31
      %s140 = sadd.s32 %s44, %s40
      %s141 = ssub.s32 %s29, %s48
      %s142 = ssub.s32 %s139, %s140
      %s143 = sor.u32 %s141, %s142
      %p144 = scmp.eq.s32.totalorder %s143, 0
      %s146 = sadd.s32 %s145, 1
      %s147 = scalar_select %p144, %s145, %s146
      %p150 = pneg %p144
      %p151 = scmp.eq.s32.totalorder %s22, 1
      %p152 = por %p150, %p151
      %p153 = scmp.ne.s32.totalorder %s145, %s148
      %p154 = scmp.eq.s32.totalorder %s22, 0
      %p155 = por %p153, %p154
      %p156 = scmp.ne.s32.totalorder %s145, %s148
      %p157 = scmp.eq.s32.totalorder %s27, 1
      %p158 = por %p156, %p157
      %p159 = scmp.ne.s32.totalorder %s148, %s149
      %p160 = scmp.eq.s32.totalorder %s27, 0
      %p161 = por %p159, %p160
      %p162 = scmp.ne.s32.totalorder %s148, %s149
      %p163 = scmp.eq.s32.totalorder %s28, 1
      %p164 = por %p162, %p163
      %p166 = scmp.ne.s32.totalorder %s149, %s165
      %p167 = scmp.eq.s32.totalorder %s28, 0
      %p168 = por %p166, %p167
      %s169 = ssub.s32 %s29, %s48
      %s170 = ssub.s32 %s30, %s44
      %s171 = sor.u32 %s169, %s170
      %p172 = scmp.eq.s32.totalorder %s171, 0
      %s174 = sadd.s32 %s173, 1
      %s175 = scalar_select %p172, %s173, %s174
      %p178 = pneg %p172
      %p179 = scmp.eq.s32.totalorder %s22, 1
      %p180 = por %p178, %p179
      %p181 = scmp.ne.s32.totalorder %s173, %s176
      %p182 = scmp.eq.s32.totalorder %s22, 0
      %p183 = por %p181, %p182
      %p184 = scmp.ne.s32.totalorder %s173, %s176
      %p185 = scmp.eq.s32.totalorder %s27, 1
      %p186 = por %p184, %p185
      %p187 = scmp.ne.s32.totalorder %s176, %s177
      %p188 = scmp.eq.s32.totalorder %s27, 0
      %p189 = por %p187, %p188
      %p190 = scmp.ne.s32.totalorder %s176, %s177
      %p191 = scmp.eq.s32.totalorder %s28, 1
      %p192 = por %p190, %p191
      %p194 = scmp.ne.s32.totalorder %s177, %s193
      %p195 = scmp.eq.s32.totalorder %s28, 0
      %p196 = por %p194, %p195
      %p197 = scmp.le.s32.totalorder 1, %s22
      %p198 = scmp.lt.s32.totalorder %s22, 3
      %p199 = pnand %p197, %p198
      %p200 = pneg %p199
      // Predicated region
      $region9: #{tpu_custom_call.1} parent=5 // pred_check
        _
      $region10: #{tpu_custom_call.1} parent=5 // pred_check_branch
        %202 = sbr.rel (%p199) target = $region12
      $region11: #{tpu_custom_call.1} parent=5 // pred_region
        %s203 = ssub.s32 %s22, 1
      $region12: #{tpu_custom_call.1} parent=5 // pred_fallthru
        _
      %p204 = scmp.lt.s32.totalorder %s22, 2
      // Predicated region
      $region13: #{tpu_custom_call.1} parent=5 // pred_check
        %p205 = pneg %p204
      $region14: #{tpu_custom_call.1} parent=5 // pred_check_branch
        %207 = sbr.rel (%p205) target = $region16
      $region15: #{tpu_custom_call.1} parent=5 // pred_region
        // Predicated region
        $region17: #{tpu_custom_call.1} parent=15 // pred_check
          %p208 = pneg %p65
        $region18: #{tpu_custom_call.1} parent=15 // pred_check_branch
          %210 = sbr.rel (%p208) target = $region20
        $region19: #{tpu_custom_call.1} parent=15 // pred_region
          %s211 = sand.u32 %s55, 1
          %s212 = scalar_lea.sflag [#allocation3], %s211
          %s213 = sand.u32 %s55, 1
          %s214 = smul.addr %s213, 8
          %s215 = scalar_lea.vmem [#allocation2], %s214
          %s216 = sadd.s32 %s30, %s31
          %s218 = ssub.s32 128, 128
          %219 = vsyncadd %s212, %s218
          %s220 = smul.addr %s29, 4
          %s221 = sadd.s32 %s216, %s220
          %s222 = smul.addr %s221, 32
          %s223 = scalar_lea.hbm %s0, %s222
          %s224 = sshll.u32 %s215, 4
          %s225 = int_to_ptr.vmem [resolvable:$true] %s224
          %230 = dma.hbm_to_vmem [thread:$0]  %s223, 128, %s225, %s212, 32, 32, 2
        $region20: #{tpu_custom_call.1} parent=15 // pred_fallthru
          _
        // Predicated region
        $region21: #{tpu_custom_call.1} parent=15 // pred_check
          %p231 = pneg %p95
        $region22: #{tpu_custom_call.1} parent=15 // pred_check_branch
          %233 = sbr.rel (%p231) target = $region24
        $region23: #{tpu_custom_call.1} parent=15 // pred_region
          %s234 = sand.u32 %s22, 1
          %s235 = scalar_lea.sflag [#allocation6], %s234
          %s236 = sand.u32 %s85, 1
          %s237 = smul.addr %s236, 8
          %s238 = scalar_lea.vmem [#allocation5], %s237
          %s239 = sadd.s32 %s30, %s31
          %s241 = ssub.s32 128, 128
          %242 = vsyncadd %s235, %s241
          %s243 = smul.addr %s29, 4
          %s244 = sadd.s32 %s239, %s243
          %s245 = smul.addr %s244, 32
          %s246 = scalar_lea.hbm %s1, %s245
          %s247 = sshll.u32 %s238, 4
          %s248 = int_to_ptr.vmem [resolvable:$true] %s247
          %253 = dma.hbm_to_vmem [thread:$0]  %s246, 128, %s248, %s235, 32, 32, 2
        $region24: #{tpu_custom_call.1} parent=15 // pred_fallthru
          _
        // Predicated region
        $region25: #{tpu_custom_call.1} parent=15 // pred_check
          %p254 = pneg %p125
        $region26: #{tpu_custom_call.1} parent=15 // pred_check_branch
          %256 = sbr.rel (%p254) target = $region28
        $region27: #{tpu_custom_call.1} parent=15 // pred_region
          %s257 = sand.u32 %s22, 1
          %s258 = scalar_lea.sflag [#allocation6], %s257
          %s259 = sand.u32 %s115, 1
          %s260 = smul.addr %s259, 8
          %s261 = scalar_lea.vmem [#allocation7], %s260
          %s262 = sadd.s32 %s30, %s31
          %s264 = ssub.s32 128, 128
          %265 = vsyncadd %s258, %s264
          %s266 = smul.addr %s29, 4
          %s267 = sadd.s32 %s262, %s266
          %s268 = smul.addr %s267, 32
          %s269 = scalar_lea.hbm %s2, %s268
          %s270 = sshll.u32 %s261, 4
          %s271 = int_to_ptr.vmem [resolvable:$true] %s270
          %276 = dma.hbm_to_vmem [thread:$0]  %s269, 128, %s271, %s258, 32, 32, 2
        $region28: #{tpu_custom_call.1} parent=15 // pred_fallthru
          _
        // Predicated region
        $region29: #{tpu_custom_call.1} parent=15 // pred_check
          %p277 = pneg %p155
        $region30: #{tpu_custom_call.1} parent=15 // pred_check_branch
          %279 = sbr.rel (%p277) target = $region32
        $region31: #{tpu_custom_call.1} parent=15 // pred_region
          %s280 = sand.u32 %s145, 1
          %s281 = scalar_lea.sflag [#allocation9], %s280
          %s282 = sand.u32 %s145, 1
          %s283 = smul.addr %s282, 10
          %s284 = scalar_lea.vmem [#allocation8], %s283
          %s285 = sadd.s32 %s30, %s31
          %s287 = ssub.s32 160, 160
          %288 = vsyncadd %s281, %s287
          %s289 = smul.addr %s29, 5
          %s290 = sadd.s32 %s285, %s289
          %s291 = smul.addr %s290, 32
          %s292 = scalar_lea.hbm %s3, %s291
          %s293 = sshll.u32 %s284, 4
          %s294 = int_to_ptr.vmem [resolvable:$true] %s293
          %299 = dma.hbm_to_vmem [thread:$0]  %s292, 160, %s294, %s281, 32, 32, 2
        $region32: #{tpu_custom_call.1} parent=15 // pred_fallthru
          _
      $region16: #{tpu_custom_call.1} parent=5 // pred_fallthru
        _
      %p300 = scmp.le.s32.totalorder 1, %s22
      %p301 = scmp.lt.s32.totalorder %s22, 3
      %p302 = pnand %p300, %p301
      %p303 = pneg %p302
      // Predicated region
      $region33: #{tpu_custom_call.1} parent=5 // pred_check
        _
      $region34: #{tpu_custom_call.1} parent=5 // pred_check_branch
        %305 = sbr.rel (%p302) target = $region36
      $region35: #{tpu_custom_call.1} parent=5 // pred_region
        %s306 = ssub.s32 %s22, 1
        %s307 = sand.u32 %s58, 1
        %s308 = scalar_lea.sflag [#allocation3], %s307
        %s309 = sand.u32 %s58, 1
        %s310 = smul.addr %s309, 8
        %s311 = scalar_lea.vmem [#allocation2], %s310
        // Predicated region
        $region37: #{tpu_custom_call.1} parent=35 // pred_check
          %p312 = pneg %p71
        $region38: #{tpu_custom_call.1} parent=35 // pred_check_branch
          %314 = sbr.rel (%p312) target = $region40
        $region39: #{tpu_custom_call.1} parent=35 // pred_region
          %315 = dma.done %s308, 128
        $region40: #{tpu_custom_call.1} parent=35 // pred_fallthru
          _
        %s316 = sand.u32 %s27, 1
        %s317 = scalar_lea.sflag [#allocation6], %s316
        %s318 = sand.u32 %s88, 1
        %s319 = smul.addr %s318, 8
        %s320 = scalar_lea.vmem [#allocation5], %s319
        // Predicated region
        $region41: #{tpu_custom_call.1} parent=35 // pred_check
          %p321 = pneg %p101
        $region42: #{tpu_custom_call.1} parent=35 // pred_check_branch
          %323 = sbr.rel (%p321) target = $region44
        $region43: #{tpu_custom_call.1} parent=35 // pred_region
          %324 = dma.done %s317, 128
        $region44: #{tpu_custom_call.1} parent=35 // pred_fallthru
          _
        %s325 = sand.u32 %s27, 1
        %s326 = scalar_lea.sflag [#allocation6], %s325
        %s327 = sand.u32 %s118, 1
        %s328 = smul.addr %s327, 8
        %s329 = scalar_lea.vmem [#allocation7], %s328
        // Predicated region
        $region45: #{tpu_custom_call.1} parent=35 // pred_check
          %p330 = pneg %p131
        $region46: #{tpu_custom_call.1} parent=35 // pred_check_branch
          %332 = sbr.rel (%p330) target = $region48
        $region47: #{tpu_custom_call.1} parent=35 // pred_region
          %333 = dma.done %s326, 128
        $region48: #{tpu_custom_call.1} parent=35 // pred_fallthru
          _
        %s334 = sand.u32 %s148, 1
        %s335 = scalar_lea.sflag [#allocation9], %s334
        %s336 = sand.u32 %s148, 1
        %s337 = smul.addr %s336, 10
        %s338 = scalar_lea.vmem [#allocation8], %s337
        // Predicated region
        $region49: #{tpu_custom_call.1} parent=35 // pred_check
          %p339 = pneg %p161
        $region50: #{tpu_custom_call.1} parent=35 // pred_check_branch
          %341 = sbr.rel (%p339) target = $region52
        $region51: #{tpu_custom_call.1} parent=35 // pred_region
          %342 = dma.done %s335, 160
        $region52: #{tpu_custom_call.1} parent=35 // pred_fallthru
          _
        %s343 = sand.u32 %s58, 1
        %s344 = scalar_lea.sflag [#allocation3], %s343
        %s345 = sand.u32 %s58, 1
        %s346 = smul.addr %s345, 8
        %s347 = scalar_lea.vmem [#allocation2], %s346
        %p348 = pneg %p71
        %p349 = pneg %p68
        %s350 = sand.u32 %s27, 1
        %s351 = scalar_lea.sflag [#allocation6], %s350
        %s352 = sand.u32 %s88, 1
        %s353 = smul.addr %s352, 8
        %s354 = scalar_lea.vmem [#allocation5], %s353
        %p355 = pneg %p101
        %p356 = pneg %p98
        %s357 = sand.u32 %s27, 1
        %s358 = scalar_lea.sflag [#allocation6], %s357
        %s359 = sand.u32 %s118, 1
        %s360 = smul.addr %s359, 8
        %s361 = scalar_lea.vmem [#allocation7], %s360
        %p362 = pneg %p131
        %p363 = pneg %p128
        %s364 = sand.u32 %s148, 1
        %s365 = scalar_lea.sflag [#allocation9], %s364
        %s366 = sand.u32 %s148, 1
        %s367 = smul.addr %s366, 10
        %s368 = scalar_lea.vmem [#allocation8], %s367
        %p369 = pneg %p161
        %p370 = pneg %p158
        %p371 = pneg %p189
        %p372 = pneg %p186
        %s373 = sand.u32 %s176, 1
        %s374 = scalar_lea.sflag [#allocation4], %s373
        %s375 = sand.u32 %s176, 1
        %s376 = smul.addr %s375, 8
        %s377 = scalar_lea.vmem [#allocation10], %s376
        %s378 = sadd.s32 %s33, %s34
        %s379 = sadd.s32 %s33, %s34
        %s380 = sadd.s32 %s33, %s34
        %s381 = sadd.s32 %s33, %s34
        %p382 = scmp.eq.s32.totalorder %s34, 0
        // Predicated region
        $region53: #{tpu_custom_call.1} parent=35 // pred_check
          %p383 = pneg %p382
        $region54: #{tpu_custom_call.1} parent=35 // pred_check_branch
          %385 = sbr.rel (%p383) target = $region56
        $region55: #{tpu_custom_call.1} parent=35 // pred_region
          %386 = vst [vmem:[%s377] sm:$0xff] 0.0
        $region56: #{tpu_custom_call.1} parent=35 // pred_fallthru
          _
        %s387 = sadd.s32 %s33, %s34
        %v388 = vlaneseq
        %v389 = vshrl.u32 %v388, 7
        %v390 = vlaneseq
        %v391 = vand.u32 %v390, 127
        %s392 = smul.u32 %s387, 2
        %v393 = vstv %s392
        %v394 = vadd.s32 %v393, %v389
        %v395 = vld [vmem:[%s311] sm:$0x3]
        %v396 = vld [vmem:[%s311 + $0x2] sm:$0x3]
        %v397 = vld [vmem:[%s311 + $0x4] sm:$0x3]
        %v398 = vld [vmem:[%s311 + $0x6] sm:$0x3]
        %v399 = vmax.f32 %v395, 0.0001
        %v400 = vmax.f32 %v396, 0.0001
        %v401 = vmax.f32 %v397, 0.0001
        %v402 = vmax.f32 %v398, 0.0001
        %v403 = vmin.f32 %v399, 0.9999
        %v404 = vmin.f32 %v400, 0.9999
        %v405 = vmin.f32 %v401, 0.9999
        %v406 = vmin.f32 %v402, 0.9999
        %v407 = vld [vmem:[%s320] sm:$0x3]
        %v408 = vld [vmem:[%s320 + $0x2] sm:$0x3]
        %v409 = vld [vmem:[%s320 + $0x4] sm:$0x3]
        %v410 = vld [vmem:[%s320 + $0x6] sm:$0x3]
        %vm411 = vcmp.eq.f32.partialorder %v407, 1.0
        %vm412 = vcmp.eq.f32.partialorder %v408, 1.0
        %vm413 = vcmp.eq.f32.partialorder %v409, 1.0
        %vm414 = vcmp.eq.f32.partialorder %v410, 1.0
        %vm415 = vcmp.lt.f32.partialorder %v407, 1.0
        %vm416 = vcmp.lt.f32.partialorder %v408, 1.0
        %vm417 = vcmp.lt.f32.partialorder %v409, 1.0
        %vm418 = vcmp.lt.f32.partialorder %v410, 1.0
        %v419 = vsub.f32 1.0, %v403
        %v420 = vsub.f32 1.0, %v404
        %v421 = vsub.f32 1.0, %v405
        %v422 = vsub.f32 1.0, %v406
        %v423 = vsub.f32 1.0, %v407
        %v424 = vsub.f32 1.0, %v408
        %v425 = vsub.f32 1.0, %v409
        %v426 = vsub.f32 1.0, %v410
        %v427 = vmul.f32 %v423, %v423
        %v428 = vmul.f32 %v424, %v424
        %v429 = vmul.f32 %v425, %v425
        %v430 = vmul.f32 %v426, %v426
        %v431 = vlog2.pop %v403
        %v432 = vmul.f32 %v431, 0.6931472
        %v433 = vlog2.pop %v404
        %v434 = vmul.f32 %v433, 0.6931472
        %v435 = vlog2.pop %v405
        %v436 = vmul.f32 %v435, 0.6931472
        %v437 = vlog2.pop %v406
        %v438 = vmul.f32 %v437, 0.6931472
        %v439 = vsub.f32 0.0, %v432
        %v440 = vsub.f32 0.0, %v434
        %v441 = vsub.f32 0.0, %v436
        %v442 = vsub.f32 0.0, %v438
        %v443 = vmul.f32 %v419, %v419
        %v444 = vmul.f32 %v420, %v420
        %v445 = vmul.f32 %v421, %v421
        %v446 = vmul.f32 %v422, %v422
        %v447 = vmul.f32 %v439, %v443
        %v448 = vmul.f32 %v440, %v444
        %v449 = vmul.f32 %v441, %v445
        %v450 = vmul.f32 %v442, %v446
        %v451 = vlog2.pop %v419
        %v452 = vmul.f32 %v451, 0.6931472
        %v453 = vlog2.pop %v420
        %v454 = vmul.f32 %v453, 0.6931472
        %v455 = vlog2.pop %v421
        %v456 = vmul.f32 %v455, 0.6931472
        %v457 = vlog2.pop %v422
        %v458 = vmul.f32 %v457, 0.6931472
        %v459 = vsub.f32 0.0, %v452
        %v460 = vsub.f32 0.0, %v454
        %v461 = vsub.f32 0.0, %v456
        %v462 = vsub.f32 0.0, %v458
        %v463 = vmul.f32 %v403, %v403
        %v464 = vmul.f32 %v404, %v404
        %v465 = vmul.f32 %v405, %v405
        %v466 = vmul.f32 %v406, %v406
        %v467 = vmul.f32 %v459, %v463
        %v468 = vmul.f32 %v460, %v464
        %v469 = vmul.f32 %v461, %v465
        %v470 = vmul.f32 %v462, %v466
        %v471 = vmul.f32 %v427, %v427
        %v472 = vmul.f32 %v428, %v428
        %v473 = vmul.f32 %v429, %v429
        %v474 = vmul.f32 %v430, %v430
        %v475 = vmul.f32 %v467, %v471
        %v476 = vmul.f32 %v468, %v472
        %v477 = vmul.f32 %v469, %v473
        %v478 = vmul.f32 %v470, %v474
        %v479 = vsel %vm411, %v447, 0.0
        %v480 = vsel %vm412, %v448, 0.0
        %v481 = vsel %vm413, %v449, 0.0
        %v482 = vsel %vm414, %v450, 0.0
        %v483 = vsel %vm415, %v475, 0.0
        %v484 = vsel %vm416, %v476, 0.0
        %v485 = vsel %vm417, %v477, 0.0
        %v486 = vsel %vm418, %v478, 0.0
        %v487 = vadd.f32 %v479, %v483
        %v488 = vadd.f32 %v480, %v484
        %v489 = vadd.f32 %v481, %v485
        %v490 = vadd.f32 %v482, %v486
        %vm491 = vcmask 1041408
        %v492 = vsel %vm491, %v487, 0.0
        %v493 = vsel %vm491, %v488, 0.0
        %v494 = vadd.f32 %v492, %v493
        %v495 = vsel %vm491, %v489, 0.0
        %v496 = vadd.f32 %v494, %v495
        %v497 = vsel %vm491, %v490, 0.0
        %v498 = vadd.f32 %v496, %v497
        %v499 = vsel %vm411, 1, 0
        %v500 = vsel %vm412, 1, 0
        %v501 = vsel %vm413, 1, 0
        %v502 = vsel %vm414, 1, 0
        %v503 = vcvt.s32.f32 %v499
        %v504 = vcvt.s32.f32 %v500
        %v505 = vcvt.s32.f32 %v501
        %v506 = vcvt.s32.f32 %v502
        %v507 = vsel %vm491, %v503, 0.0
        %v508 = vsel %vm491, %v504, 0.0
        %v509 = vadd.f32 %v507, %v508
        %v510 = vsel %vm491, %v505, 0.0
        %v511 = vadd.f32 %v509, %v510
        %v512 = vsel %vm491, %v506, 0.0
        %v513 = vadd.f32 %v511, %v512
        %v514 = vld [vmem:[%s338] sm:$0x3]
        %v515 = vld [vmem:[%s338 + $0x2] sm:$0x3]
        %v516 = vld [vmem:[%s338 + $0x4] sm:$0x3]
        %v517 = vld [vmem:[%s338 + $0x6] sm:$0x3]
        %v518 = vld [vmem:[%s338 + $0x8] sm:$0x3]
        %vm519 = vcmp.gt.f32.partialorder %v518, 0.0
        %v520 = vsel %vm519, %v518, 0.0
        %v521 = vld [vmem:[%s329] sm:$0x3]
        %v522 = vld [vmem:[%s329 + $0x2] sm:$0x3]
        %v523 = vld [vmem:[%s329 + $0x4] sm:$0x3]
        %v524 = vld [vmem:[%s329 + $0x6] sm:$0x3]
        %v525 = vsel %vm519, 1, 0
        %vm526 = vcmp.eq.s32.totalorder %v525, 1
        %v527 = vsel %vm526, %v521, 0.0
        %v528 = vsel %vm526, %v522, 0.0
        %v529 = vsel %vm526, %v523, 0.0
        %v530 = vsel %vm526, %v524, 0.0
        %v531 = vmul.f32 %v527, 1.442695
        %v532 = vpow.pop %v531
        %v533 = vmul.f32 %v528, 1.442695
        %v534 = vpow.pop %v533
        %v535 = vmul.f32 %v529, 1.442695
        %v536 = vpow.pop %v535
        %v537 = vmul.f32 %v530, 1.442695
        %v538 = vpow.pop %v537
        %v539 = vmul.u32 %v394, 128
        %v540 = vadd.s32 %v539, %v391
        %v541 = vshra.s32 %v540, 4
        %v542 = vcvt.s32.f32 %v541
        %v543 = vand.u32 %v540, 15
        %v544 = vcvt.s32.f32 %v543
        %v545 = vsub.f32 %v544, %v532
        %v546 = vmul.f32 %v545, 4.0
        %v547 = vsub.f32 %v542, %v534
        %v548 = vmul.f32 %v547, 4.0
        %v549 = vadd.f32 %v544, %v536
        %v550 = vmul.f32 %v549, 4.0
        %v551 = vadd.f32 %v542, %v538
        %v552 = vmul.f32 %v551, 4.0
        %v553 = vsel %vm519, %v514, 0.0
        %v554 = vsel %vm519, %v515, 0.0
        %v555 = vsel %vm519, %v516, 8.0
        %v556 = vsel %vm519, %v517, 8.0
        %v557 = vmax.f32 %v546, %v553
        %v558 = vmax.f32 %v548, %v554
        %v559 = vmin.f32 %v550, %v555
        %v560 = vmin.f32 %v552, %v556
        %v561 = vsub.f32 %v559, %v557
        %v562 = vmax.f32 %v561, 0.0
        %v563 = vsub.f32 %v560, %v558
        %v564 = vmax.f32 %v563, 0.0
        %v565 = vmul.f32 %v562, %v564
        %v566 = vsub.f32 %v550, %v546
        %v567 = vmax.f32 %v566, 0.0
        %v568 = vsub.f32 %v552, %v548
        %v569 = vmax.f32 %v568, 0.0
        %v570 = vsub.f32 %v555, %v553
        %v571 = vmax.f32 %v570, 0.0
        %v572 = vsub.f32 %v556, %v554
        %v573 = vmax.f32 %v572, 0.0
        %v574 = vmul.f32 %v567, %v569
        %v575 = vmul.f32 %v571, %v573
        %v576 = vadd.f32 %v574, %v575
        %v577 = vsub.f32 %v576, %v565
        %v578 = vmax.f32 %v577, 0.0001
        %v579 = vrcp.pop %v578
        %v580 = vmul.f32 %v565, %v579
        %v581 = vmin.f32 %v546, %v553
        %v582 = vmin.f32 %v548, %v554
        %v583 = vmax.f32 %v550, %v555
        %v584 = vmax.f32 %v552, %v556
        %v585 = vsub.f32 %v583, %v581
        %v586 = vmax.f32 %v585, 0.0
        %v587 = vsub.f32 %v584, %v582
        %v588 = vmax.f32 %v587, 0.0
        %v589 = vmul.f32 %v586, %v586
        %v590 = vmul.f32 %v588, %v588
        %v591 = vadd.f32 %v589, %v590
        %v592 = vmax.f32 %v591, 0.0001
        %v593 = vadd.f32 %v546, %v550
        %v594 = vadd.f32 %v553, %v555
        %v595 = vsub.f32 %v593, %v594
        %v596 = vadd.f32 %v548, %v552
        %v597 = vadd.f32 %v554, %v556
        %v598 = vsub.f32 %v596, %v597
        %v599 = vmul.f32 %v595, %v595
        %v600 = vmul.f32 %v598, %v598
        %v601 = vadd.f32 %v599, %v600
        %v602 = vmul.f32 %v601, 0.25
        %v603 = vmul.f32 %v571, %v569
        %v604 = vmul.f32 %v567, %v573
        %v605 = vsub.f32 %v603, %v604
        %v606 = vand.u32 2147483647, %v605
        %v607 = vmul.f32 %v573, %v569
        %v608 = vmul.f32 %v571, %v567
        %v609 = vadd.f32 %v607, %v608
        %v610 = vmax.f32 %v609, 1e-20
        %v611 = vrcp.pop %v610
        %v612 = vmul.f32 %v606, %v611
        %vm613 = vcmp.gt.f32.partialorder %v612, 2.4142137
        %vm614 = vcmp.gt.f32.partialorder %v612, 0.41421357
        %vm615 = vmxor %vm613, 1
        %vm616 = vmand %vm614, %vm615
        %v617 = vmax.f32 %v612, 1e-30
        %v618 = vrcp.pop %v617
        %v619 = vsub.f32 0.0, %v618
        %v620 = vsub.f32 %v612, 1.0
        %v621 = vadd.f32 %v612, 1.0
        %v622 = vrcp.pop %v621
        %v623 = vmul.f32 %v620, %v622
        %v624 = vsel %vm616, %v623, %v612
        %v625 = vsel %vm613, %v619, %v624
        %v626 = vsel %vm616, 0.7853982, 0.0
        %v627 = vsel %vm613, 1.5707964, %v626
        %v628 = vmul.f32 %v625, %v625
        %v629 = vmul.f32 %v628, 0.080537446
        %v630 = vsub.f32 %v629, 0.13877685
        %v631 = vmul.f32 %v630, %v628
        %v632 = vadd.f32 %v631, 0.19977711
        %v633 = vmul.f32 %v632, %v628
        %v634 = vsub.f32 %v633, 0.3333295
        %v635 = vmul.f32 %v634, %v628
        %v636 = vmul.f32 %v635, %v625
        %v637 = vadd.f32 %v636, %v625
        %v638 = vadd.f32 %v627, %v637
        %v639 = vmul.f32 %v638, 0.40528473
        %v640 = vmul.f32 %v639, %v638
        %v641 = vsub.f32 1.0, %v580
        %v642 = vadd.f32 %v641, %v640
        %v643 = vmax.f32 %v642, 0.0001
        %v644 = vrcp.pop %v643
        %v645 = vmul.f32 %v640, %v644
        %v646 = vrcp.pop %v592
        %v647 = vmul.f32 %v602, %v646
        %v648 = vmul.f32 %v640, %v645
        %v649 = vadd.f32 %v647, %v648
        %v650 = vsub.f32 %v580, %v649
        %v651 = vsub.f32 1.0, %v650
        %v652 = vmul.f32 %v651, %v520
        %v653 = vsel %vm519, %v652, 0.0
        %v654 = vsel %vm491, %v498, 0.0
        %v655 = vrot.slane %v654, 4
        %v656 = vadd.f32 %v654, %v655
        %v657 = vrot.slane %v656, 2
        %v658 = vadd.f32 %v656, %v657
        %v659 = vrot.slane %v658, 1
        %v660 = vadd.f32 %v658, %v659
        %v661 = vsel %vm491, %v513, 0.0
        %v662 = vrot.slane %v661, 4
        %v663 = vadd.f32 %v661, %v662
        %v664 = vrot.slane %v663, 2
        %v665 = vadd.f32 %v663, %v664
        %v666 = vrot.slane %v665, 1
        %v667 = vadd.f32 %v665, %v666
        %v668 = vsel %vm491, %v653, 0.0
        %v669 = vrot.slane %v668, 4
        %v670 = vadd.f32 %v668, %v669
        %v671 = vrot.slane %v670, 2
        %v672 = vadd.f32 %v670, %v671
        %v673 = vrot.slane %v672, 1
        %v674 = vadd.f32 %v672, %v673
        %v675 = vsel %vm491, %v520, 0.0
        %v676 = vrot.slane %v675, 4
        %v677 = vadd.f32 %v675, %v676
        %v678 = vrot.slane %v677, 2
        %v679 = vadd.f32 %v677, %v678
        %v680 = vrot.slane %v679, 1
        %v681 = vadd.f32 %v679, %v680
        %vm682 = vcmask 1040384
        %v683 = vsel %vm682, %v660, %v667
        %v684 = vsel %vm491, %v683, %v674
        %vm685 = vcmask 1042432
        %v686 = vsel %vm685, %v684, %v681
        %vm687 = vcmask 1043456
        %v688 = vsel %vm687, %v686, 0.0
        %v689 = vld [vmem:[%s377] sm:$0xff]
        %v690 = vadd.f32 %v689, %v688
        %691 = vst [vmem:[%s377] sm:$0xff] %v690
        %s692 = sand.u32 %s176, 1
        %s693 = scalar_lea.sflag [#allocation4], %s692
        %s694 = sand.u32 %s176, 1
        %s695 = smul.addr %s694, 8
        %s696 = scalar_lea.vmem [#allocation10], %s695
        // Predicated region
        $region57: #{tpu_custom_call.1} parent=35 // pred_check
          %p697 = pneg %p186
        $region58: #{tpu_custom_call.1} parent=35 // pred_check_branch
          %699 = sbr.rel (%p697) target = $region60
        $region59: #{tpu_custom_call.1} parent=35 // pred_region
          %s701 = ssub.s32 128, 128
          %702 = vsyncadd %s693, %s701
          %s703 = sadd.s32 %s33, %s32
          %s704 = smul.addr %s703, 128
          %s705 = scalar_lea.hbm %s4, %s704
          %s707 = sshll.u32 %s696, 4
          %s708 = int_to_ptr.vmem [resolvable:$true] %s707
          %710 = dma.vmem_to_hbm [thread:$0]  %s708, 128, %s705, %s693
        $region60: #{tpu_custom_call.1} parent=35 // pred_fallthru
          _
      $region36: #{tpu_custom_call.1} parent=5 // pred_fallthru
        _
      %p711 = scmp.le.s32.totalorder 2, %s22
      // Predicated region
      $region61: #{tpu_custom_call.1} parent=5 // pred_check
        %p712 = pneg %p711
      $region62: #{tpu_custom_call.1} parent=5 // pred_check_branch
        %714 = sbr.rel (%p712) target = $region64
      $region63: #{tpu_custom_call.1} parent=5 // pred_region
        %s715 = ssub.s32 %s22, 2
        // Predicated region
        $region65: #{tpu_custom_call.1} parent=63 // pred_check
          %p716 = pneg %p192
        $region66: #{tpu_custom_call.1} parent=63 // pred_check_branch
          %718 = sbr.rel (%p716) target = $region68
        $region67: #{tpu_custom_call.1} parent=63 // pred_region
          %s719 = sand.u32 %s177, 1
          %s720 = scalar_lea.sflag [#allocation4], %s719
          %s721 = sand.u32 %s177, 1
          %s722 = smul.addr %s721, 8
          %s723 = scalar_lea.vmem [#allocation10], %s722
          %724 = dma.done %s720, 128
        $region68: #{tpu_custom_call.1} parent=63 // pred_fallthru
          _
      $region64: #{tpu_custom_call.1} parent=5 // pred_fallthru
        _
    $region6: #{tpu_custom_call.1} parent=1 // loop_footer
      %s26 = sadd.s32 1, %s22
    $region7: #{tpu_custom_call.1} parent=1 // loop_footer_branch
      %21 = sbr.rel target = $region3
    $region8: #{tpu_custom_call.1} parent=1 // loop_exit
      _
    %725 = vsyncpa [#allocation3], 1
    %s726 = scalar_lea.sflag [#allocation3], 1
    %727 = vsyncpa %s726, 1
    %728 = vsyncpa [#allocation6], 1
    %s729 = scalar_lea.sflag [#allocation6], 1
    %730 = vsyncpa %s729, 1
    %731 = vsyncpa [#allocation9], 1
    %s732 = scalar_lea.sflag [#allocation9], 1
    %733 = vsyncpa %s732, 1
    %734 = vsyncpa [#allocation4], 1
    %s735 = scalar_lea.sflag [#allocation4], 1
    %736 = vsyncpa %s735, 1

</llo_original>
